<compile_context>
chip_gen: v7x
topology: tpu7x:2x2x1
jax: 0.10.0
libtpu: 0.0.40
codegen_flags: <defaults>
</compile_context>

<pallas_src>
import functools

import jax
import jax.numpy as jnp
from jax import lax
from jax.experimental import pallas as pl
from jax.experimental.pallas import tpu as pltpu


def _round_up(x, m):
    return ((x + m - 1) // m) * m


def _cdiv(a, b):
    return -(-a // b)


def _ring_positions(K):
    """Kernel taps (ky, kx) grouped by Chebyshev ring around the center tap."""
    rge = K // 2
    rings = []
    for i in range(rge + 1):
        rings.append([(ky, kx) for ky in range(K) for kx in range(K)
                      if max(abs(ky - rge), abs(kx - rge)) == i])
    return rings


def _vmem_bytes(shape, dtype):
    """Conservative VMEM footprint (last dim -> 128 lanes, 2nd-last -> sublanes)."""
    it = jnp.dtype(dtype).itemsize
    dims = list(shape)
    if len(dims) >= 1:
        dims[-1] = _round_up(dims[-1], 128)
    if len(dims) >= 2:
        dims[-2] = _round_up(dims[-2], max(1, 32 // it))
    n = 1
    for d in dims:
        n *= d
    return n * it


def _charge_conv_kernel(xm_ref, xh_ref, w_ref, b_ref, a_ref, bt_ref, o_ref,
                        slab_ref, *, K, stride, dilation, th, wo, cin, rings):
    """One grid step = one image x one tile of `th` output rows (all of Wo)."""
    rge = K // 2
    R = th * stride            # rows covered by the main input block
    Hh = 2 * rge * dilation    # halo rows

    # Assemble the (R + Hh, Wp, Cin) input slab: main row block + bottom halo.
    slab_ref[0:R, :, :] = xm_ref[0]
    slab_ref[R:R + Hh, :, :] = xh_ref[0]

    def tap_dot(ky, kx):
        r0 = ky * dilation
        c0 = kx * dilation
        if stride == 1:
            v = slab_ref[r0:r0 + th, c0:c0 + wo, :]
        else:
            v = slab_ref[pl.ds(r0, th, stride), pl.ds(c0, wo, stride), :]
        v = v.reshape(th * wo, cin)
        return jnp.dot(v, w_ref[ky * K + kx],
                       preferred_element_type=jnp.float32)

    # scale 0: center tap (the 1x1 convolution)
    raw = tap_dot(rge, rge)
    scc = raw + b_ref[0:1, :]
    a_sel = a_ref[0:1, :]          # a_ref = 1 + tanh(alpha), hoisted in wrapper
    bt_sel = bt_ref[0:1, :]

    # scales 1..rge: add only the newly uncovered ring taps, then charge/select
    for i in range(1, rge + 1):
        for (ky, kx) in rings[i]:
            raw = raw + tap_dot(ky, kx)
        new = raw + b_ref[i:i + 1, :]
        cmp = new > scc
        scc = jnp.maximum(new, scc)
        a_sel = jnp.where(cmp, a_ref[i:i + 1, :], a_sel)
        bt_sel = jnp.where(cmp, bt_ref[i:i + 1, :], bt_sel)

    out = scc * a_sel + bt_sel
    o_ref[...] = out.reshape(1, th, wo, o_ref.shape[-1]).astype(o_ref.dtype)


def conv2d_charge(x_nchw, weight, bias, alpha, beta, *, stride=1, dilation=1,
                  block_rows=64, compute_dtype=jnp.bfloat16, out_dtype=None,
                  out_layout="NCHW"):
    """Forward pass of the PyTorch Conv2d module (eval mode). NCHW input."""
    N, Cin, H, W = x_nchw.shape
    Cout, Cin_w, K, K2 = weight.shape
    assert Cin == Cin_w and K == K2, "groups > 1 / non-square kernels unsupported"
    assert K % 2 == 1 and K >= 3, "kernel_size must be odd and >= 3"
    rge = K // 2
    S = rge + 1
    assert bias.shape == (S, Cout), bias.shape
    assert alpha.shape == (S, Cout, 1, 1), alpha.shape
    assert beta.shape == (S, Cout, 1, 1), beta.shape
    assert out_layout in ("NCHW", "NHWC")
    out_dtype = x_nchw.dtype if out_dtype is None else out_dtype
    cdt = jnp.dtype(compute_dtype)
    rings = _ring_positions(K)

    pad = rge * dilation
    halo = 2 * pad
    Ho = (H - 1) // stride + 1
    Wo = (W - 1) // stride + 1

    # ---- lane / sublane padding -------------------------------------------
    kind = ""
    try:
        kind = jax.devices()[0].device_kind.lower()
    except Exception:
        pass
    lane = 256 if (Cout > 128 and "v5" not in kind) else 128
    Cout_pad = _round_up(Cout, lane)
    sub = 16 if cdt.itemsize < 4 else 8
    Wo_pad = _round_up(Wo, sub)        # keeps in-kernel reshapes layout-trivial
    Wp_pad = max(2 * pad + (Wo_pad - 1) * stride + 1, W + 2 * pad)

    # ---- per-chip VMEM budget ----------------------------------------------
    try:
        cap = int(pltpu.get_tpu_info().vmem_capacity_bytes)
    except Exception:
        cap = 64 * 1024 * 1024
    budget = max(16 * 1024 * 1024,
                 min(cap - 16 * 1024 * 1024, (3 * cap) // 4))

    def vmem_est(th_):
        R_ = th_ * stride
        m_tile = th_ * Wo_pad
        b = 2 * _vmem_bytes((R_, Wp_pad, Cin), cdt)              # main blocks (x2)
        b += 2 * _vmem_bytes((halo, Wp_pad, Cin), cdt)           # halo blocks (x2)
        b += 1 * _vmem_bytes((K * K, Cin, Cout_pad), cdt)        # weights (x1)
        b += 3 * _vmem_bytes((S, Cout_pad), jnp.float32)         # tables  (x1)
        b += 2 * _vmem_bytes((th_, Wo_pad, Cout_pad), out_dtype) # out blocks (x2)
        b += _vmem_bytes((R_ + halo, Wp_pad, Cin), cdt)          # scratch slab
        b += 6 * _vmem_bytes((m_tile, Cout_pad), jnp.float32)    # live f32 temps
        return b

    # ---- choose the output-row tile ----------------------------------------
    th_cap = max(halo, _round_up(min(block_rows, Ho), halo))
    t_target = max(1, _cdiv(8, N))                    # want >= ~8 grid steps
    th_steps = max(halo, _round_up(_cdiv(Ho, t_target), halo))
    th = min(th_cap, th_steps)
    while vmem_est(th) > budget and th > halo:        # shrink, don't clamp limit
        th = max(halo, _round_up(th // 2, halo))

    T = _cdiv(Ho, th)
    Ho_pad = T * th
    R = th * stride
    Hp_pad = (T + 1) * R                              # multiple of R and of halo

    # ---- glue (one fused XLA pass): NHWC + zero-pad + cast -----------------
    x_nhwc = jnp.transpose(x_nchw, (0, 2, 3, 1)).astype(cdt)
    x_pad = jnp.pad(x_nhwc, ((0, 0),
                             (pad, Hp_pad - H - pad),
                             (pad, Wp_pad - W - pad),
                             (0, 0)))

    # ---- weights as (K*K, Cin, Cout_pad) taps; f32 scalar tables ------------
    w_taps = jnp.transpose(weight, (2, 3, 1, 0)).reshape(K * K, Cin, Cout)
    w_taps = jnp.pad(w_taps, ((0, 0), (0, 0), (0, Cout_pad - Cout))).astype(cdt)
    pad_c = ((0, 0), (0, Cout_pad - Cout))
    b_stack = jnp.pad(bias.astype(jnp.float32), pad_c)
    a_stack = jnp.pad(1.0 + jnp.tanh(alpha.reshape(S, Cout).astype(jnp.float32)),
                      pad_c)                                   # hoisted tanh
    bt_stack = jnp.pad(beta.reshape(S, Cout).astype(jnp.float32), pad_c)

    const = pl.Buffered(1)            # grid-invariant operands: single buffer
    rh = R // halo                    # halo block index stride (R % halo == 0)

    in_specs = [
        pl.BlockSpec((1, R, Wp_pad, Cin), lambda n, t: (n, t, 0, 0)),
        pl.BlockSpec((1, halo, Wp_pad, Cin),
                     lambda n, t: (n, (t + 1) * rh, 0, 0)),
        pl.BlockSpec((K * K, Cin, Cout_pad), lambda n, t: (0, 0, 0),
                     pipeline_mode=const),
        pl.BlockSpec((S, Cout_pad), lambda n, t: (0, 0), pipeline_mode=const),
        pl.BlockSpec((S, Cout_pad), lambda n, t: (0, 0), pipeline_mode=const),
        pl.BlockSpec((S, Cout_pad), lambda n, t: (0, 0), pipeline_mode=const),
    ]
    out_spec = pl.BlockSpec((1, th, Wo_pad, Cout_pad), lambda n, t: (n, t, 0, 0))

    out = pl.pallas_call(
        functools.partial(_charge_conv_kernel, K=K, stride=stride,
                          dilation=dilation, th=th, wo=Wo_pad, cin=Cin,
                          rings=rings),
        out_shape=jax.ShapeDtypeStruct((N, Ho_pad, Wo_pad, Cout_pad), out_dtype),
        grid_spec=pltpu.PrefetchScalarGridSpec(
            num_scalar_prefetch=0,
            grid=(N, T),
            in_specs=in_specs,
            out_specs=out_spec,
            scratch_shapes=[pltpu.VMEM((R + halo, Wp_pad, Cin), cdt)]),
        compiler_params=pltpu.CompilerParams(
            dimension_semantics=("parallel", "parallel"),
            vmem_limit_bytes=int(budget)),
    )(x_pad, x_pad, w_taps, b_stack, a_stack, bt_stack)

    out = out[:, :Ho, :Wo, :Cout]                     # crop padding (NHWC)
    if out_layout == "NHWC":
        return out
    return jnp.transpose(out, (0, 3, 1, 2))           # drop-in NCHW


def _reference_forward(x, weight, bias, alpha, beta, *, stride=1, dilation=1):
    """Pure-JAX reference (mirrors the PyTorch eval-mode forward)."""
    rge = weight.shape[-1] // 2
    dn = lax.conv_dimension_numbers(x.shape, weight.shape,
                                    ('NCHW', 'OIHW', 'NCHW'))
    scc = lax.conv_general_dilated(
        x, weight[:, :, rge:rge + 1, rge:rge + 1], (stride, stride),
        [(0, 0), (0, 0)], rhs_dilation=(1, 1), dimension_numbers=dn)
    scc = scc + bias[0][None, :, None, None]
    output = scc * (1.0 + jnp.tanh(alpha[0]))[None] + beta[0][None]
    for i in range(1, rge + 1):
        w_i = weight[:, :, rge - i:rge + i + 1, rge - i:rge + i + 1]
        p = i * dilation
        new = lax.conv_general_dilated(
            x, w_i, (stride, stride), [(p, p), (p, p)],
            rhs_dilation=(dilation, dilation), dimension_numbers=dn)
        new = new + bias[i][None, :, None, None]
        cmp = new > scc
        output = jnp.where(cmp, new * (1.0 + jnp.tanh(alpha[i]))[None] + beta[i][None],
                           output)
        scc = jnp.where(cmp, new, scc)
    return output


if __name__ == "__main__":
    # small, module-consistent shapes
    N, Cin, H, W = 2, 4, 16, 16
    Cout, K = 8, 3
    rge = K // 2
    stride, dilation = 1, 1

    key = jax.random.PRNGKey(0)
    kx_, kw_, kb_, ka_, kbe_ = jax.random.split(key, 5)

    x = jax.random.normal(kx_, (N, Cin, H, W), dtype=jnp.float32)
    weight = jax.random.uniform(kw_, (Cout, Cin, K, K), minval=-1.0, maxval=1.0)
    bias = jax.random.uniform(kb_, (rge + 1, Cout), minval=-1.0, maxval=1.0)
    alpha = jax.random.uniform(ka_, (rge + 1, Cout, 1, 1), minval=-1.0, maxval=1.0)
    beta = jax.random.uniform(kbe_, (rge + 1, Cout, 1, 1), minval=-1.0, maxval=1.0)

    # ---- fast path: bf16 MXU inputs, f32 accumulation, bf16 NHWC output ----
    # NOTE: the comparator `new > scc` runs on bf16-rounded matmul inputs; for
    # parity-sensitive layers use compute_dtype=jnp.float32 (checked below).
    out_fast = jax.block_until_ready(
        conv2d_charge(x, weight, bias, alpha, beta, stride=stride,
                      dilation=dilation, out_dtype=jnp.bfloat16,
                      out_layout="NHWC"))
    x_q = x.astype(jnp.bfloat16).astype(jnp.float32)
    w_q = weight.astype(jnp.bfloat16).astype(jnp.float32)
    ref_q = _reference_forward(x_q, w_q, bias, alpha, beta,
                               stride=stride, dilation=dilation)
    ref_q_nhwc = jnp.transpose(ref_q, (0, 2, 3, 1))
    assert out_fast.shape == (N, H, W, Cout), out_fast.shape
    close = jnp.isclose(out_fast.astype(jnp.float32), ref_q_nhwc,
                        rtol=2e-2, atol=2e-2)
    frac_bad = 1.0 - jnp.mean(close.astype(jnp.float32))
    assert frac_bad <= 2e-3, f"bf16 path mismatch fraction {frac_bad}"

    # ---- f32 compute path, drop-in NCHW, vs full-precision reference -------
    out_f32 = jax.block_until_ready(
        conv2d_charge(x, weight, bias, alpha, beta, stride=stride,
                      dilation=dilation, compute_dtype=jnp.float32))
    ref = jax.block_until_ready(
        _reference_forward(x, weight, bias, alpha, beta,
                           stride=stride, dilation=dilation))
    assert out_f32.shape == ref.shape == (N, Cout, H, W)
    # tolerate a vanishing fraction of `new > scc` tie flips from differing
    # f32 summation orders between the Pallas dots and the XLA convs.
    close = jnp.isclose(out_f32, ref, rtol=1e-3, atol=1e-3)
    frac_bad = 1.0 - jnp.mean(close.astype(jnp.float32))
    assert frac_bad <= 2e-3, f"f32 path mismatch fraction {frac_bad}"

    print("KERNEL_OK")
</pallas_src>

<mosaic_0001>
module attributes {stable_mosaic.version = 11 : i64} {
  func.func @_charge_conv_kernel(%arg0: i32, %arg1: i32, %arg2: memref<1x4x18x4xbf16, #tpu.memory_space<vmem>>, %arg3: memref<1x2x18x4xbf16, #tpu.memory_space<vmem>>, %arg4: memref<9x4x128xbf16, #tpu.memory_space<vmem>>, %arg5: memref<2x128xf32, #tpu.memory_space<vmem>>, %arg6: memref<2x128xf32, #tpu.memory_space<vmem>>, %arg7: memref<2x128xf32, #tpu.memory_space<vmem>>, %arg8: memref<1x4x16x128xbf16, #tpu.memory_space<vmem>>, %arg9: memref<6x18x4xbf16, #tpu.memory_space<vmem>>) attributes {dimension_semantics = [#tpu.dimension_semantics<parallel>, #tpu.dimension_semantics<parallel>], iteration_bounds = array<i64: 2, 4>, scalar_prefetch = 0 : i64, scratch_operands = 1 : i64, tpu.core_type = #tpu.core_type<tc>, window_params = [{transform_indices = @transform_0, window_bounds = array<i64: 1, 4, 18, 4>}, {transform_indices = @transform_1, window_bounds = array<i64: 1, 2, 18, 4>}, {pipeline_mode = #tpu.pipeline_mode<synchronous>, transform_indices = @transform_2, window_bounds = array<i64: 9, 4, 128>}, {pipeline_mode = #tpu.pipeline_mode<synchronous>, transform_indices = @transform_3, window_bounds = array<i64: 2, 128>}, {pipeline_mode = #tpu.pipeline_mode<synchronous>, transform_indices = @transform_4, window_bounds = array<i64: 2, 128>}, {pipeline_mode = #tpu.pipeline_mode<synchronous>, transform_indices = @transform_5, window_bounds = array<i64: 2, 128>}, {transform_indices = @transform_6, window_bounds = array<i64: 1, 4, 16, 128>}]} {
    %c0 = arith.constant 0 : index
    %c0_0 = arith.constant 0 : index
    %c0_1 = arith.constant 0 : index
    %c0_2 = arith.constant 0 : index
    %0 = vector.load %arg2[%c0, %c0_0, %c0_1, %c0_2] : memref<1x4x18x4xbf16, #tpu.memory_space<vmem>>, vector<1x4x18x4xbf16>
    %1 = vector.shape_cast %0 : vector<1x4x18x4xbf16> to vector<4x18x4xbf16>
    %c0_3 = arith.constant 0 : index
    %c0_4 = arith.constant 0 : index
    %c0_5 = arith.constant 0 : index
    %2 = vector.load %arg9[%c0_3, %c0_4, %c0_5] : memref<6x18x4xbf16, #tpu.memory_space<vmem>>, vector<4x18x4xbf16>
    tpu.vector_store %arg9[%c0_3, %c0_4, %c0_5], %1 {strides = array<i32>} : memref<6x18x4xbf16, #tpu.memory_space<vmem>>, vector<4x18x4xbf16>,
    %c0_6 = arith.constant 0 : index
    %c0_7 = arith.constant 0 : index
    %c0_8 = arith.constant 0 : index
    %c0_9 = arith.constant 0 : index
    %3 = vector.load %arg3[%c0_6, %c0_7, %c0_8, %c0_9] : memref<1x2x18x4xbf16, #tpu.memory_space<vmem>>, vector<1x2x18x4xbf16>
    %4 = vector.shape_cast %3 : vector<1x2x18x4xbf16> to vector<2x18x4xbf16>
    %c4 = arith.constant 4 : index
    %c0_10 = arith.constant 0 : index
    %c0_11 = arith.constant 0 : index
    %5 = vector.load %arg9[%c4, %c0_10, %c0_11] : memref<6x18x4xbf16, #tpu.memory_space<vmem>>, vector<2x18x4xbf16>
    tpu.vector_store %arg9[%c4, %c0_10, %c0_11], %4 {strides = array<i32>} : memref<6x18x4xbf16, #tpu.memory_space<vmem>>, vector<2x18x4xbf16>,
    %c1 = arith.constant 1 : index
    %c1_12 = arith.constant 1 : index
    %c0_13 = arith.constant 0 : index
    %6 = vector.load %arg9[%c1, %c1_12, %c0_13] : memref<6x18x4xbf16, #tpu.memory_space<vmem>>, vector<4x16x4xbf16>
    %7 = vector.shape_cast %6 : vector<4x16x4xbf16> to vector<64x4xbf16>
    %c4_14 = arith.constant 4 : index
    %c0_15 = arith.constant 0 : index
    %c0_16 = arith.constant 0 : index
    %8 = vector.load %arg4[%c4_14, %c0_15, %c0_16] : memref<9x4x128xbf16, #tpu.memory_space<vmem>>, vector<1x4x128xbf16>
    %9 = vector.shape_cast %8 : vector<1x4x128xbf16> to vector<4x128xbf16>
    %cst = arith.constant dense<0.000000e+00> : vector<64x128xf32>
    %10 = tpu.matmul %7, %9, %cst {dimension_numbers = #tpu.dot_dimension_numbers<[1], [0], [0], [1], [0, 0, 1, 1], [], []>} : vector<64x4xbf16>, vector<4x128xbf16>, vector<64x128xf32> -> vector<64x128xf32>
    %c0_17 = arith.constant 0 : index
    %c0_18 = arith.constant 0 : index
    %11 = vector.load %arg5[%c0_17, %c0_18] : memref<2x128xf32, #tpu.memory_space<vmem>>, vector<1x128xf32>
    %12 = vector.broadcast %11 : vector<1x128xf32> to vector<64x128xf32>
    %13 = arith.addf %10, %12 : vector<64x128xf32>
    %c0_19 = arith.constant 0 : index
    %c0_20 = arith.constant 0 : index
    %14 = vector.load %arg6[%c0_19, %c0_20] : memref<2x128xf32, #tpu.memory_space<vmem>>, vector<1x128xf32>
    %c0_21 = arith.constant 0 : index
    %c0_22 = arith.constant 0 : index
    %15 = vector.load %arg7[%c0_21, %c0_22] : memref<2x128xf32, #tpu.memory_space<vmem>>, vector<1x128xf32>
    %c0_23 = arith.constant 0 : index
    %c0_24 = arith.constant 0 : index
    %c0_25 = arith.constant 0 : index
    %16 = vector.load %arg9[%c0_23, %c0_24, %c0_25] : memref<6x18x4xbf16, #tpu.memory_space<vmem>>, vector<4x16x4xbf16>
    %17 = vector.shape_cast %16 : vector<4x16x4xbf16> to vector<64x4xbf16>
    %c0_26 = arith.constant 0 : index
    %c0_27 = arith.constant 0 : index
    %c0_28 = arith.constant 0 : index
    %18 = vector.load %arg4[%c0_26, %c0_27, %c0_28] : memref<9x4x128xbf16, #tpu.memory_space<vmem>>, vector<1x4x128xbf16>
    %19 = vector.shape_cast %18 : vector<1x4x128xbf16> to vector<4x128xbf16>
    %cst_29 = arith.constant dense<0.000000e+00> : vector<64x128xf32>
    %20 = tpu.matmul %17, %19, %cst_29 {dimension_numbers = #tpu.dot_dimension_numbers<[1], [0], [0], [1], [0, 0, 1, 1], [], []>} : vector<64x4xbf16>, vector<4x128xbf16>, vector<64x128xf32> -> vector<64x128xf32>
    %21 = arith.addf %10, %20 : vector<64x128xf32>
    %c0_30 = arith.constant 0 : index
    %c1_31 = arith.constant 1 : index
    %c0_32 = arith.constant 0 : index
    %22 = vector.load %arg9[%c0_30, %c1_31, %c0_32] : memref<6x18x4xbf16, #tpu.memory_space<vmem>>, vector<4x16x4xbf16>
    %23 = vector.shape_cast %22 : vector<4x16x4xbf16> to vector<64x4xbf16>
    %c1_33 = arith.constant 1 : index
    %c0_34 = arith.constant 0 : index
    %c0_35 = arith.constant 0 : index
    %24 = vector.load %arg4[%c1_33, %c0_34, %c0_35] : memref<9x4x128xbf16, #tpu.memory_space<vmem>>, vector<1x4x128xbf16>
    %25 = vector.shape_cast %24 : vector<1x4x128xbf16> to vector<4x128xbf16>
    %cst_36 = arith.constant dense<0.000000e+00> : vector<64x128xf32>
    %26 = tpu.matmul %23, %25, %cst_36 {dimension_numbers = #tpu.dot_dimension_numbers<[1], [0], [0], [1], [0, 0, 1, 1], [], []>} : vector<64x4xbf16>, vector<4x128xbf16>, vector<64x128xf32> -> vector<64x128xf32>
    %27 = arith.addf %21, %26 : vector<64x128xf32>
    %c0_37 = arith.constant 0 : index
    %c2 = arith.constant 2 : index
    %c0_38 = arith.constant 0 : index
    %28 = vector.load %arg9[%c0_37, %c2, %c0_38] : memref<6x18x4xbf16, #tpu.memory_space<vmem>>, vector<4x16x4xbf16>
    %29 = vector.shape_cast %28 : vector<4x16x4xbf16> to vector<64x4xbf16>
    %c2_39 = arith.constant 2 : index
    %c0_40 = arith.constant 0 : index
    %c0_41 = arith.constant 0 : index
    %30 = vector.load %arg4[%c2_39, %c0_40, %c0_41] : memref<9x4x128xbf16, #tpu.memory_space<vmem>>, vector<1x4x128xbf16>
    %31 = vector.shape_cast %30 : vector<1x4x128xbf16> to vector<4x128xbf16>
    %cst_42 = arith.constant dense<0.000000e+00> : vector<64x128xf32>
    %32 = tpu.matmul %29, %31, %cst_42 {dimension_numbers = #tpu.dot_dimension_numbers<[1], [0], [0], [1], [0, 0, 1, 1], [], []>} : vector<64x4xbf16>, vector<4x128xbf16>, vector<64x128xf32> -> vector<64x128xf32>
    %33 = arith.addf %27, %32 : vector<64x128xf32>
    %c1_43 = arith.constant 1 : index
    %c0_44 = arith.constant 0 : index
    %c0_45 = arith.constant 0 : index
    %34 = vector.load %arg9[%c1_43, %c0_44, %c0_45] : memref<6x18x4xbf16, #tpu.memory_space<vmem>>, vector<4x16x4xbf16>
    %35 = vector.shape_cast %34 : vector<4x16x4xbf16> to vector<64x4xbf16>
    %c3 = arith.constant 3 : index
    %c0_46 = arith.constant 0 : index
    %c0_47 = arith.constant 0 : index
    %36 = vector.load %arg4[%c3, %c0_46, %c0_47] : memref<9x4x128xbf16, #tpu.memory_space<vmem>>, vector<1x4x128xbf16>
    %37 = vector.shape_cast %36 : vector<1x4x128xbf16> to vector<4x128xbf16>
    %cst_48 = arith.constant dense<0.000000e+00> : vector<64x128xf32>
    %38 = tpu.matmul %35, %37, %cst_48 {dimension_numbers = #tpu.dot_dimension_numbers<[1], [0], [0], [1], [0, 0, 1, 1], [], []>} : vector<64x4xbf16>, vector<4x128xbf16>, vector<64x128xf32> -> vector<64x128xf32>
    %39 = arith.addf %33, %38 : vector<64x128xf32>
    %c1_49 = arith.constant 1 : index
    %c2_50 = arith.constant 2 : index
    %c0_51 = arith.constant 0 : index
    %40 = vector.load %arg9[%c1_49, %c2_50, %c0_51] : memref<6x18x4xbf16, #tpu.memory_space<vmem>>, vector<4x16x4xbf16>
    %41 = vector.shape_cast %40 : vector<4x16x4xbf16> to vector<64x4xbf16>
    %c5 = arith.constant 5 : index
    %c0_52 = arith.constant 0 : index
    %c0_53 = arith.constant 0 : index
    %42 = vector.load %arg4[%c5, %c0_52, %c0_53] : memref<9x4x128xbf16, #tpu.memory_space<vmem>>, vector<1x4x128xbf16>
    %43 = vector.shape_cast %42 : vector<1x4x128xbf16> to vector<4x128xbf16>
    %cst_54 = arith.constant dense<0.000000e+00> : vector<64x128xf32>
    %44 = tpu.matmul %41, %43, %cst_54 {dimension_numbers = #tpu.dot_dimension_numbers<[1], [0], [0], [1], [0, 0, 1, 1], [], []>} : vector<64x4xbf16>, vector<4x128xbf16>, vector<64x128xf32> -> vector<64x128xf32>
    %45 = arith.addf %39, %44 : vector<64x128xf32>
    %c2_55 = arith.constant 2 : index
    %c0_56 = arith.constant 0 : index
    %c0_57 = arith.constant 0 : index
    %46 = vector.load %arg9[%c2_55, %c0_56, %c0_57] : memref<6x18x4xbf16, #tpu.memory_space<vmem>>, vector<4x16x4xbf16>
    %47 = vector.shape_cast %46 : vector<4x16x4xbf16> to vector<64x4xbf16>
    %c6 = arith.constant 6 : index
    %c0_58 = arith.constant 0 : index
    %c0_59 = arith.constant 0 : index
    %48 = vector.load %arg4[%c6, %c0_58, %c0_59] : memref<9x4x128xbf16, #tpu.memory_space<vmem>>, vector<1x4x128xbf16>
    %49 = vector.shape_cast %48 : vector<1x4x128xbf16> to vector<4x128xbf16>
    %cst_60 = arith.constant dense<0.000000e+00> : vector<64x128xf32>
    %50 = tpu.matmul %47, %49, %cst_60 {dimension_numbers = #tpu.dot_dimension_numbers<[1], [0], [0], [1], [0, 0, 1, 1], [], []>} : vector<64x4xbf16>, vector<4x128xbf16>, vector<64x128xf32> -> vector<64x128xf32>
    %51 = arith.addf %45, %50 : vector<64x128xf32>
    %c2_61 = arith.constant 2 : index
    %c1_62 = arith.constant 1 : index
    %c0_63 = arith.constant 0 : index
    %52 = vector.load %arg9[%c2_61, %c1_62, %c0_63] : memref<6x18x4xbf16, #tpu.memory_space<vmem>>, vector<4x16x4xbf16>
    %53 = vector.shape_cast %52 : vector<4x16x4xbf16> to vector<64x4xbf16>
    %c7 = arith.constant 7 : index
    %c0_64 = arith.constant 0 : index
    %c0_65 = arith.constant 0 : index
    %54 = vector.load %arg4[%c7, %c0_64, %c0_65] : memref<9x4x128xbf16, #tpu.memory_space<vmem>>, vector<1x4x128xbf16>
    %55 = vector.shape_cast %54 : vector<1x4x128xbf16> to vector<4x128xbf16>
    %cst_66 = arith.constant dense<0.000000e+00> : vector<64x128xf32>
    %56 = tpu.matmul %53, %55, %cst_66 {dimension_numbers = #tpu.dot_dimension_numbers<[1], [0], [0], [1], [0, 0, 1, 1], [], []>} : vector<64x4xbf16>, vector<4x128xbf16>, vector<64x128xf32> -> vector<64x128xf32>
    %57 = arith.addf %51, %56 : vector<64x128xf32>
    %c2_67 = arith.constant 2 : index
    %c2_68 = arith.constant 2 : index
    %c0_69 = arith.constant 0 : index
    %58 = vector.load %arg9[%c2_67, %c2_68, %c0_69] : memref<6x18x4xbf16, #tpu.memory_space<vmem>>, vector<4x16x4xbf16>
    %59 = vector.shape_cast %58 : vector<4x16x4xbf16> to vector<64x4xbf16>
    %c8 = arith.constant 8 : index
    %c0_70 = arith.constant 0 : index
    %c0_71 = arith.constant 0 : index
    %60 = vector.load %arg4[%c8, %c0_70, %c0_71] : memref<9x4x128xbf16, #tpu.memory_space<vmem>>, vector<1x4x128xbf16>
    %61 = vector.shape_cast %60 : vector<1x4x128xbf16> to vector<4x128xbf16>
    %cst_72 = arith.constant dense<0.000000e+00> : vector<64x128xf32>
    %62 = tpu.matmul %59, %61, %cst_72 {dimension_numbers = #tpu.dot_dimension_numbers<[1], [0], [0], [1], [0, 0, 1, 1], [], []>} : vector<64x4xbf16>, vector<4x128xbf16>, vector<64x128xf32> -> vector<64x128xf32>
    %63 = arith.addf %57, %62 : vector<64x128xf32>
    %c1_73 = arith.constant 1 : index
    %c0_74 = arith.constant 0 : index
    %64 = vector.load %arg5[%c1_73, %c0_74] : memref<2x128xf32, #tpu.memory_space<vmem>>, vector<1x128xf32>
    %65 = vector.broadcast %64 : vector<1x128xf32> to vector<64x128xf32>
    %66 = arith.addf %63, %65 : vector<64x128xf32>
    %67 = arith.cmpf ogt, %66, %13 : vector<64x128xf32>
    %68 = arith.maximumf %66, %13 : vector<64x128xf32>
    %c1_75 = arith.constant 1 : index
    %c0_76 = arith.constant 0 : index
    %69 = vector.load %arg6[%c1_75, %c0_76] : memref<2x128xf32, #tpu.memory_space<vmem>>, vector<1x128xf32>
    %70 = vector.shape_cast %69 : vector<1x128xf32> to vector<1x128xf32>
    %71 = vector.broadcast %70 : vector<1x128xf32> to vector<64x128xf32>
    %72 = vector.shape_cast %14 : vector<1x128xf32> to vector<1x128xf32>
    %73 = vector.broadcast %72 : vector<1x128xf32> to vector<64x128xf32>
    %74 = arith.select %67, %71, %73 : vector<64x128xi1>, vector<64x128xf32>
    %c1_77 = arith.constant 1 : index
    %c0_78 = arith.constant 0 : index
    %75 = vector.load %arg7[%c1_77, %c0_78] : memref<2x128xf32, #tpu.memory_space<vmem>>, vector<1x128xf32>
    %76 = vector.shape_cast %75 : vector<1x128xf32> to vector<1x128xf32>
    %77 = vector.broadcast %76 : vector<1x128xf32> to vector<64x128xf32>
    %78 = vector.shape_cast %15 : vector<1x128xf32> to vector<1x128xf32>
    %79 = vector.broadcast %78 : vector<1x128xf32> to vector<64x128xf32>
    %80 = arith.select %67, %77, %79 : vector<64x128xi1>, vector<64x128xf32>
    %81 = arith.mulf %68, %74 : vector<64x128xf32>
    %82 = arith.addf %81, %80 : vector<64x128xf32>
    %83 = vector.shape_cast %82 : vector<64x128xf32> to vector<1x4x16x128xf32>
    %84 = arith.truncf %83 : vector<1x4x16x128xf32> to vector<1x4x16x128xbf16>
    %c0_79 = arith.constant 0 : index
    %c0_80 = arith.constant 0 : index
    %c0_81 = arith.constant 0 : index
    %c0_82 = arith.constant 0 : index
    %85 = vector.load %arg8[%c0_79, %c0_80, %c0_81, %c0_82] : memref<1x4x16x128xbf16, #tpu.memory_space<vmem>>, vector<1x4x16x128xbf16>
    tpu.vector_store %arg8[%c0_79, %c0_80, %c0_81, %c0_82], %84 {strides = array<i32>} : memref<1x4x16x128xbf16, #tpu.memory_space<vmem>>, vector<1x4x16x128xbf16>,
    return
  }
  func.func @transform_0(%arg0: i32, %arg1: i32) -> (i32, i32, i32, i32) {
    %c0_i32 = arith.constant 0 : i32
    %c0_i32_0 = arith.constant 0 : i32
    %c0_i32_1 = arith.constant 0 : i32
    return %arg0, %arg1, %c0_i32, %c0_i32_0 : i32, i32, i32, i32
  }
  func.func @transform_1(%arg0: i32, %arg1: i32) -> (i32, i32, i32, i32) {
    %c1_i32 = arith.constant 1 : i32
    %0 = arith.addi %arg1, %c1_i32 : i32
    %c2_i32 = arith.constant 2 : i32
    %1 = arith.muli %0, %c2_i32 : i32
    %c0_i32 = arith.constant 0 : i32
    %c0_i32_0 = arith.constant 0 : i32
    %c0_i32_1 = arith.constant 0 : i32
    return %arg0, %1, %c0_i32, %c0_i32_0 : i32, i32, i32, i32
  }
  func.func @transform_2(%arg0: i32, %arg1: i32) -> (i32, i32, i32) {
    %c0_i32 = arith.constant 0 : i32
    %c0_i32_0 = arith.constant 0 : i32
    %c0_i32_1 = arith.constant 0 : i32
    %c0_i32_2 = arith.constant 0 : i32
    return %c0_i32, %c0_i32_0, %c0_i32_1 : i32, i32, i32
  }
  func.func @transform_3(%arg0: i32, %arg1: i32) -> (i32, i32) {
    %c0_i32 = arith.constant 0 : i32
    %c0_i32_0 = arith.constant 0 : i32
    %c0_i32_1 = arith.constant 0 : i32
    return %c0_i32, %c0_i32_0 : i32, i32
  }
  func.func @transform_4(%arg0: i32, %arg1: i32) -> (i32, i32) {
    %c0_i32 = arith.constant 0 : i32
    %c0_i32_0 = arith.constant 0 : i32
    %c0_i32_1 = arith.constant 0 : i32
    return %c0_i32, %c0_i32_0 : i32, i32
  }
  func.func @transform_5(%arg0: i32, %arg1: i32) -> (i32, i32) {
    %c0_i32 = arith.constant 0 : i32
    %c0_i32_0 = arith.constant 0 : i32
    %c0_i32_1 = arith.constant 0 : i32
    return %c0_i32, %c0_i32_0 : i32, i32
  }
  func.func @transform_6(%arg0: i32, %arg1: i32) -> (i32, i32, i32, i32) {
    %c0_i32 = arith.constant 0 : i32
    %c0_i32_0 = arith.constant 0 : i32
    %c0_i32_1 = arith.constant 0 : i32
    return %arg0, %arg1, %c0_i32, %c0_i32_0 : i32, i32, i32, i32
  }
}

</mosaic_0001>

<llo_original>
// kernel: tpu_custom_call.1
$region0: #{tpu_custom_call.1}
  #allocation0 [shape = 'u32[]', space=smem, size = 0x4, offset = 0x4, fixed_abs, tag = 'smem constant byte address 0x4 - core index']
  #allocation1 [shape = 'u32[144,128]{1,0:T(1,128)}', space=vmem, size = 0x12000, scoped, tag = 'internal scratch']
  #allocation2 [shape = 'bf16[6,18,4]{2,1,0:T(8,128)(2,1)}', space=vmem, size = 0x9000, scoped, tag = 'scratch operand']
  %s0 = inlined_call_operand.vmem [shape: bf16[2,20,18,4], index: 0, kind: input, shape index: {}]
  %s1 = inlined_call_operand.vmem [shape: bf16[2,20,18,4], index: 1, kind: input, shape index: {}]
  %s2 = inlined_call_operand.vmem [shape: bf16[9,4,128], index: 2, kind: input, shape index: {}]
  %s3 = inlined_call_operand.vmem [shape: f32[2,128], index: 3, kind: input, shape index: {}]
  %s4 = inlined_call_operand.vmem [shape: f32[2,128], index: 4, kind: input, shape index: {}]
  %s5 = inlined_call_operand.vmem [shape: f32[2,128], index: 5, kind: input, shape index: {}]
  %s6 = inlined_call_operand.hbm [shape: bf16[2,16,16,128], index: 6, kind: output, shape index: {}]
  %s7 = sld [smem:[#allocation0]]
  $region57: #{tpu_custom_call.1} parent=0
    _
  %s9 = ssub.s32 1, %s7
  %s10 = scalar_select 0, %s9, %s7
  $region1: #{tpu_custom_call.1} parent=0
    #allocation3 [shape = 'u8[32768]{0}', space=vmem, size = 0x8000, scoped, tag = 'output window, operand 0']
    #allocation4 [shape = 's32[2]{0}', space=sflag, size = 0x8, scoped, tag = 'scoped memory for tpu_custom_call.1']
    %11 = vsyncpa [#allocation4], 0
    %s12 = scalar_lea.sflag [#allocation4], 1
    %13 = vsyncpa %s12, 0
    loop: start=0, step=1, limit=10
    $region2: #{tpu_custom_call.1} parent=1 // loop_pre_header
      _
    $region3: #{tpu_custom_call.1} parent=1 // loop_header
      %s15 = sphi 0, %s19
      %p16 = scmp.ge.s32.totalorder %s15, 10
      %s22 = sphi 0, %s34
      %s23 = sphi 0, %s30
      %s24 = sphi 0, %s22
      %s25 = sphi 0, %s23
      %s26 = sphi 0, %s24
      %s27 = sphi 0, %s25
      %s39 = sphi 0, %s41
      %s42 = sphi 0, %s39
      %s43 = sphi 0, %s42
      %s59 = sphi 0, %s43
      %s71 = sphi 0, %s73
      %s74 = sphi 0, %s71
      %s75 = sphi 0, %s74
      %s91 = sphi 0, %s75
      %s95 = sphi 0, %s95
      %s97 = sphi 0, %s95
      %s98 = sphi 0, %s97
      %s112 = sphi 0, %s98
      %s116 = sphi 0, %s116
      %s118 = sphi 0, %s116
      %s119 = sphi 0, %s118
      %s133 = sphi 0, %s119
      %s137 = sphi 0, %s137
      %s139 = sphi 0, %s137
      %s140 = sphi 0, %s139
      %s154 = sphi 0, %s140
      %s158 = sphi 0, %s158
      %s160 = sphi 0, %s158
      %s161 = sphi 0, %s160
      %s175 = sphi 0, %s161
      %s183 = sphi 0, %s185
      %s186 = sphi 0, %s183
      %s187 = sphi 0, %s186
      %s203 = sphi 0, %s187
    $region4: #{tpu_custom_call.1} parent=1 // loop_header_branch
      %18 = sbr.rel (%p16) target = $region8
    $region5: #{tpu_custom_call.1} parent=1 // loop_body
      %s20 = ssub.s32 %s15, 1
      %s21 = ssub.s32 %s15, 2
      %s28 = sadd.s32 1, %s23
      %p29 = scmp.ge.s32.totalorder %s28, 4
      %s30 = scalar_select %p29, 0, %s28
      %s31 = sadd.s32 1, %s22
      %s32 = scalar_select %p29, %s31, %s22
      %p33 = scmp.ge.s32.totalorder %s32, 2
      %s34 = scalar_select %p33, 0, %s32
      %s35 = ssub.s32 %s22, %s34
      %s36 = ssub.s32 %s23, %s30
      %s37 = sor.u32 %s35, %s36
      %p38 = scmp.eq.s32.totalorder %s37, 0
      %s40 = sadd.s32 %s39, 1
      %s41 = scalar_select %p38, %s39, %s40
      %p44 = pneg %p38
      %p45 = scmp.eq.s32.totalorder %s15, 7
      %p46 = por %p44, %p45
      %p47 = scmp.ne.s32.totalorder %s39, %s42
      %p48 = scmp.eq.s32.totalorder %s15, 0
      %p49 = por %p47, %p48
      %p50 = scmp.ne.s32.totalorder %s39, %s42
      %p51 = scmp.eq.s32.totalorder %s20, 7
      %p52 = por %p50, %p51
      %p53 = scmp.ne.s32.totalorder %s42, %s43
      %p54 = scmp.eq.s32.totalorder %s20, 0
      %p55 = por %p53, %p54
      %p56 = scmp.ne.s32.totalorder %s42, %s43
      %p57 = scmp.eq.s32.totalorder %s21, 7
      %p58 = por %p56, %p57
      %p60 = scmp.ne.s32.totalorder %s43, %s59
      %p61 = scmp.eq.s32.totalorder %s21, 0
      %p62 = por %p60, %p61
      %s63 = sadd.s32 %s23, 1
      %s64 = smul.u32 %s63, 2
      %s65 = sadd.s32 %s30, 1
      %s66 = smul.u32 %s65, 2
      %s67 = ssub.s32 %s22, %s34
      %s68 = ssub.s32 %s64, %s66
      %s69 = sor.u32 %s67, %s68
      %p70 = scmp.eq.s32.totalorder %s69, 0
      %s72 = sadd.s32 %s71, 1
      %s73 = scalar_select %p70, %s71, %s72
      %p76 = pneg %p70
      %p77 = scmp.eq.s32.totalorder %s15, 7
      %p78 = por %p76, %p77
      %p79 = scmp.ne.s32.totalorder %s71, %s74
      %p80 = scmp.eq.s32.totalorder %s15, 0
      %p81 = por %p79, %p80
      %p82 = scmp.ne.s32.totalorder %s71, %s74
      %p83 = scmp.eq.s32.totalorder %s20, 7
      %p84 = por %p82, %p83
      %p85 = scmp.ne.s32.totalorder %s74, %s75
      %p86 = scmp.eq.s32.totalorder %s20, 0
      %p87 = por %p85, %p86
      %p88 = scmp.ne.s32.totalorder %s74, %s75
      %p89 = scmp.eq.s32.totalorder %s21, 7
      %p90 = por %p88, %p89
      %p92 = scmp.ne.s32.totalorder %s75, %s91
      %p93 = scmp.eq.s32.totalorder %s21, 0
      %p94 = por %p92, %p93
      %s96 = sadd.s32 %s95, 1
      %p99 = scmp.eq.s32.totalorder %s15, 7
      %p100 = scmp.ne.s32.totalorder %s95, %s97
      %p101 = scmp.eq.s32.totalorder %s15, 0
      %p102 = por %p100, %p101
      %p103 = scmp.ne.s32.totalorder %s95, %s97
      %p104 = scmp.eq.s32.totalorder %s20, 7
      %p105 = por %p103, %p104
      %p106 = scmp.ne.s32.totalorder %s97, %s98
      %p107 = scmp.eq.s32.totalorder %s20, 0
      %p108 = por %p106, %p107
      %p109 = scmp.ne.s32.totalorder %s97, %s98
      %p110 = scmp.eq.s32.totalorder %s21, 7
      %p111 = por %p109, %p110
      %p113 = scmp.ne.s32.totalorder %s98, %s112
      %p114 = scmp.eq.s32.totalorder %s21, 0
      %p115 = por %p113, %p114
      %s117 = sadd.s32 %s116, 1
      %p120 = scmp.eq.s32.totalorder %s15, 7
      %p121 = scmp.ne.s32.totalorder %s116, %s118
      %p122 = scmp.eq.s32.totalorder %s15, 0
      %p123 = por %p121, %p122
      %p124 = scmp.ne.s32.totalorder %s116, %s118
      %p125 = scmp.eq.s32.totalorder %s20, 7
      %p126 = por %p124, %p125
      %p127 = scmp.ne.s32.totalorder %s118, %s119
      %p128 = scmp.eq.s32.totalorder %s20, 0
      %p129 = por %p127, %p128
      %p130 = scmp.ne.s32.totalorder %s118, %s119
      %p131 = scmp.eq.s32.totalorder %s21, 7
      %p132 = por %p130, %p131
      %p134 = scmp.ne.s32.totalorder %s119, %s133
      %p135 = scmp.eq.s32.totalorder %s21, 0
      %p136 = por %p134, %p135
      %s138 = sadd.s32 %s137, 1
      %p141 = scmp.eq.s32.totalorder %s15, 7
      %p142 = scmp.ne.s32.totalorder %s137, %s139
      %p143 = scmp.eq.s32.totalorder %s15, 0
      %p144 = por %p142, %p143
      %p145 = scmp.ne.s32.totalorder %s137, %s139
      %p146 = scmp.eq.s32.totalorder %s20, 7
      %p147 = por %p145, %p146
      %p148 = scmp.ne.s32.totalorder %s139, %s140
      %p149 = scmp.eq.s32.totalorder %s20, 0
      %p150 = por %p148, %p149
      %p151 = scmp.ne.s32.totalorder %s139, %s140
      %p152 = scmp.eq.s32.totalorder %s21, 7
      %p153 = por %p151, %p152
      %p155 = scmp.ne.s32.totalorder %s140, %s154
      %p156 = scmp.eq.s32.totalorder %s21, 0
      %p157 = por %p155, %p156
      %s159 = sadd.s32 %s158, 1
      %p162 = scmp.eq.s32.totalorder %s15, 7
      %p163 = scmp.ne.s32.totalorder %s158, %s160
      %p164 = scmp.eq.s32.totalorder %s15, 0
      %p165 = por %p163, %p164
      %p166 = scmp.ne.s32.totalorder %s158, %s160
      %p167 = scmp.eq.s32.totalorder %s20, 7
      %p168 = por %p166, %p167
      %p169 = scmp.ne.s32.totalorder %s160, %s161
      %p170 = scmp.eq.s32.totalorder %s20, 0
      %p171 = por %p169, %p170
      %p172 = scmp.ne.s32.totalorder %s160, %s161
      %p173 = scmp.eq.s32.totalorder %s21, 7
      %p174 = por %p172, %p173
      %p176 = scmp.ne.s32.totalorder %s161, %s175
      %p177 = scmp.eq.s32.totalorder %s21, 0
      %p178 = por %p176, %p177
      %s179 = ssub.s32 %s22, %s34
      %s180 = ssub.s32 %s23, %s30
      %s181 = sor.u32 %s179, %s180
      %p182 = scmp.eq.s32.totalorder %s181, 0
      %s184 = sadd.s32 %s183, 1
      %s185 = scalar_select %p182, %s183, %s184
      %p188 = pneg %p182
      %p189 = scmp.eq.s32.totalorder %s15, 7
      %p190 = por %p188, %p189
      %p191 = scmp.ne.s32.totalorder %s183, %s186
      %p192 = scmp.eq.s32.totalorder %s15, 0
      %p193 = por %p191, %p192
      %p194 = scmp.ne.s32.totalorder %s183, %s186
      %p195 = scmp.eq.s32.totalorder %s20, 7
      %p196 = por %p194, %p195
      %p197 = scmp.ne.s32.totalorder %s186, %s187
      %p198 = scmp.eq.s32.totalorder %s20, 0
      %p199 = por %p197, %p198
      %p200 = scmp.ne.s32.totalorder %s186, %s187
      %p201 = scmp.eq.s32.totalorder %s21, 7
      %p202 = por %p200, %p201
      %p204 = scmp.ne.s32.totalorder %s187, %s203
      %p205 = scmp.eq.s32.totalorder %s21, 0
      %p206 = por %p204, %p205
      %p207 = scmp.le.s32.totalorder 1, %s15
      %p208 = scmp.lt.s32.totalorder %s15, 9
      %p209 = pnand %p207, %p208
      %p210 = pneg %p209
      // Predicated region
      $region9: #{tpu_custom_call.1} parent=5 // pred_check
        _
      $region10: #{tpu_custom_call.1} parent=5 // pred_check_branch
        %212 = sbr.rel (%p209) target = $region12
      $region11: #{tpu_custom_call.1} parent=5 // pred_region
        %s213 = ssub.s32 %s15, 1
        // Predicated region
        $region13: #{tpu_custom_call.1} parent=11 // pred_check
          %p214 = pneg %p108
        $region14: #{tpu_custom_call.1} parent=11 // pred_check_branch
          %216 = sbr.rel (%p214) target = $region16
        $region15: #{tpu_custom_call.1} parent=11 // pred_region
          _
        $region16: #{tpu_custom_call.1} parent=11 // pred_fallthru
          _
        // Predicated region
        $region17: #{tpu_custom_call.1} parent=11 // pred_check
          %p217 = pneg %p129
        $region18: #{tpu_custom_call.1} parent=11 // pred_check_branch
          %219 = sbr.rel (%p217) target = $region20
        $region19: #{tpu_custom_call.1} parent=11 // pred_region
          _
        $region20: #{tpu_custom_call.1} parent=11 // pred_fallthru
          _
        // Predicated region
        $region21: #{tpu_custom_call.1} parent=11 // pred_check
          %p220 = pneg %p150
        $region22: #{tpu_custom_call.1} parent=11 // pred_check_branch
          %222 = sbr.rel (%p220) target = $region24
        $region23: #{tpu_custom_call.1} parent=11 // pred_region
          _
        $region24: #{tpu_custom_call.1} parent=11 // pred_fallthru
          _
        // Predicated region
        $region25: #{tpu_custom_call.1} parent=11 // pred_check
          %p223 = pneg %p171
        $region26: #{tpu_custom_call.1} parent=11 // pred_check_branch
          %225 = sbr.rel (%p223) target = $region28
        $region27: #{tpu_custom_call.1} parent=11 // pred_region
          _
        $region28: #{tpu_custom_call.1} parent=11 // pred_fallthru
          _
      $region12: #{tpu_custom_call.1} parent=5 // pred_fallthru
        _
      %p226 = scmp.lt.s32.totalorder %s15, 8
      // Predicated region
      $region29: #{tpu_custom_call.1} parent=5 // pred_check
        %p227 = pneg %p226
      $region30: #{tpu_custom_call.1} parent=5 // pred_check_branch
        %229 = sbr.rel (%p227) target = $region32
      $region31: #{tpu_custom_call.1} parent=5 // pred_region
        // Predicated region
        $region33: #{tpu_custom_call.1} parent=31 // pred_check
          %p230 = pneg %p49
        $region34: #{tpu_custom_call.1} parent=31 // pred_check_branch
          %232 = sbr.rel (%p230) target = $region36
        $region35: #{tpu_custom_call.1} parent=31 // pred_region
          %s233 = smul.u32 4, %s23
          %p234 = scmp.lt.s32.totalorder %s22, 1
          %s235 = scalar_select %p234, %s22, 1
          %p236 = scmp.lt.s32.totalorder %s233, 19
          %s237 = scalar_select %p236, %s233, 19
          %s238 = smul.addr %s237, 3
          %s239 = smul.addr %s235, 60
          %s240 = sadd.s32 %s238, %s239
          %s241 = smul.addr %s240, 4
          %s242 = scalar_lea.vmem %s0, %s241
          %s243 = smul.u32 4, %s23
        $region36: #{tpu_custom_call.1} parent=31 // pred_fallthru
          _
        // Predicated region
        $region37: #{tpu_custom_call.1} parent=31 // pred_check
          %p244 = pneg %p81
        $region38: #{tpu_custom_call.1} parent=31 // pred_check_branch
          %246 = sbr.rel (%p244) target = $region40
        $region39: #{tpu_custom_call.1} parent=31 // pred_region
          %s247 = sadd.s32 %s23, 1
          %s248 = smul.u32 %s247, 2
          %s249 = smul.u32 2, %s248
          %p250 = scmp.lt.s32.totalorder %s22, 1
          %s251 = scalar_select %p250, %s22, 1
          %p252 = scmp.lt.s32.totalorder %s249, 19
          %s253 = scalar_select %p252, %s249, 19
          %s254 = smul.addr %s253, 3
          %s255 = smul.addr %s251, 60
          %s256 = sadd.s32 %s254, %s255
          %s257 = smul.addr %s256, 4
          %s258 = scalar_lea.vmem %s1, %s257
          %s259 = sadd.s32 %s23, 1
          %s260 = smul.u32 %s259, 2
          %s261 = smul.u32 2, %s260
        $region40: #{tpu_custom_call.1} parent=31 // pred_fallthru
          _
      $region32: #{tpu_custom_call.1} parent=5 // pred_fallthru
        _
      %p262 = scmp.le.s32.totalorder 1, %s15
      %p263 = scmp.lt.s32.totalorder %s15, 9
      %p264 = pnand %p262, %p263
      %p265 = pneg %p264
      // Predicated region
      $region41: #{tpu_custom_call.1} parent=5 // pred_check
        _
      $region42: #{tpu_custom_call.1} parent=5 // pred_check_branch
        %267 = sbr.rel (%p264) target = $region44
      $region43: #{tpu_custom_call.1} parent=5 // pred_region
        %s268 = ssub.s32 %s15, 1
        %s269 = smul.u32 4, %s25
        %p270 = scmp.lt.s32.totalorder %s24, 1
        %s271 = scalar_select %p270, %s24, 1
        %p272 = scmp.lt.s32.totalorder %s269, 19
        %s273 = scalar_select %p272, %s269, 19
        %s274 = smul.addr %s273, 3
        %s275 = smul.addr %s271, 60
        %s276 = sadd.s32 %s274, %s275
        %s277 = smul.addr %s276, 4
        %s278 = scalar_lea.vmem %s0, %s277
        %p279 = pneg %p55
        %p280 = pneg %p52
        %s281 = sadd.s32 %s25, 1
        %s282 = smul.u32 %s281, 2
        %s283 = smul.u32 2, %s282
        %p284 = scmp.lt.s32.totalorder %s24, 1
        %s285 = scalar_select %p284, %s24, 1
        %p286 = scmp.lt.s32.totalorder %s283, 19
        %s287 = scalar_select %p286, %s283, 19
        %s288 = smul.addr %s287, 3
        %s289 = smul.addr %s285, 60
        %s290 = sadd.s32 %s288, %s289
        %s291 = smul.addr %s290, 4
        %s292 = scalar_lea.vmem %s1, %s291
        %p293 = pneg %p87
        %p294 = pneg %p84
        %p295 = pneg %p108
        %p296 = pneg %p105
        %p297 = pneg %p129
        %p298 = pneg %p126
        %p299 = pneg %p150
        %p300 = pneg %p147
        %p301 = pneg %p171
        %p302 = pneg %p168
        %p303 = pneg %p199
        %p304 = pneg %p196
        %s305 = sand.u32 %s186, 1
        %s306 = scalar_lea.sflag [#allocation4], %s305
        %s307 = sand.u32 %s186, 1
        %s308 = smul.addr %s307, 32
        %s309 = scalar_lea.vmem [#allocation3], %s308
        %s310 = smul.u32 4, %s25
        %p311 = scmp.lt.s32.totalorder %s24, 1
        %s312 = scalar_select %p311, %s24, 1
        %p313 = scmp.lt.s32.totalorder %s310, 19
        %s314 = scalar_select %p313, %s310, 19
        %s315 = smul.addr %s314, 3
        %s316 = smul.addr %s312, 60
        %s317 = sadd.s32 %s315, %s316
        %s318 = smul.addr %s317, 4
        %s319 = scalar_lea.vmem %s0, %s318
        %s320 = smul.u32 4, %s25
        %s321 = sadd.s32 %s25, 1
        %s322 = smul.u32 %s321, 2
        %s323 = smul.u32 2, %s322
        %p324 = scmp.lt.s32.totalorder %s24, 1
        %s325 = scalar_select %p324, %s24, 1
        %p326 = scmp.lt.s32.totalorder %s323, 19
        %s327 = scalar_select %p326, %s323, 19
        %s328 = smul.addr %s327, 3
        %s329 = smul.addr %s325, 60
        %s330 = sadd.s32 %s328, %s329
        %s331 = smul.addr %s330, 4
        %s332 = scalar_lea.vmem %s1, %s331
        %s333 = sadd.s32 %s25, 1
        %s334 = smul.u32 %s333, 2
        %s335 = smul.u32 2, %s334
        %s336 = smul.u32 4, %s25
        %v338 = vld [vmem:[%s319] sm:$0xf]
        %v339 = vld [vmem:[%s319 + $0x4] sm:$0xf]
        %v340 = vld [vmem:[%s319 + $0x8] sm:$0x1]
        %v341 = vld [vmem:[%s319 + $0xc] sm:$0xf]
        %v342 = vld [vmem:[%s319 + $0x10] sm:$0xf]
        %v343 = vld [vmem:[%s319 + $0x14] sm:$0x1]
        %v344 = vld [vmem:[%s319 + $0x18] sm:$0xf]
        %v345 = vld [vmem:[%s319 + $0x1c] sm:$0xf]
        %v346 = vld [vmem:[%s319 + $0x20] sm:$0x1]
        %v347 = vld [vmem:[%s319 + $0x24] sm:$0xf]
        %v348 = vld [vmem:[%s319 + $0x28] sm:$0xf]
        %v349 = vld [vmem:[%s319 + $0x2c] sm:$0x1]
        %vm350 = vcmask 27648
        %351 = vst.msk [vmem:[#allocation2] sm:$0xf] %vm350, %v338
        %352 = vst.msk [vmem:[#allocation2 + $0x4] sm:$0xf] %vm350, %v339
        %vm353 = vcmask 24576
        %354 = vst.msk [vmem:[#allocation2 + $0x8] sm:$0x1] %vm353, %v340
        %355 = vst.msk [vmem:[#allocation2 + $0xc] sm:$0xf] %vm350, %v341
        %356 = vst.msk [vmem:[#allocation2 + $0x10] sm:$0xf] %vm350, %v342
        %357 = vst.msk [vmem:[#allocation2 + $0x14] sm:$0x1] %vm353, %v343
        %358 = vst.msk [vmem:[#allocation2 + $0x18] sm:$0xf] %vm350, %v344
        %359 = vst.msk [vmem:[#allocation2 + $0x1c] sm:$0xf] %vm350, %v345
        %360 = vst.msk [vmem:[#allocation2 + $0x20] sm:$0x1] %vm353, %v346
        %361 = vst.msk [vmem:[#allocation2 + $0x24] sm:$0xf] %vm350, %v347
        %362 = vst.msk [vmem:[#allocation2 + $0x28] sm:$0xf] %vm350, %v348
        %363 = vst.msk [vmem:[#allocation2 + $0x2c] sm:$0x1] %vm353, %v349
        %v364 = vld [vmem:[%s332] sm:$0xf]
        %v365 = vld [vmem:[%s332 + $0x4] sm:$0xf]
        %v366 = vld [vmem:[%s332 + $0x8] sm:$0x1]
        %v367 = vld [vmem:[%s332 + $0xc] sm:$0xf]
        %v368 = vld [vmem:[%s332 + $0x10] sm:$0xf]
        %v369 = vld [vmem:[%s332 + $0x14] sm:$0x1]
        %s370 = scalar_lea.vmem [#allocation2], 48
        %371 = vst.msk [vmem:[%s370] sm:$0xf] %vm350, %v364
        %372 = vst.msk [vmem:[%s370 + $0x4] sm:$0xf] %vm350, %v365
        %373 = vst.msk [vmem:[%s370 + $0x8] sm:$0x1] %vm353, %v366
        %374 = vst.msk [vmem:[%s370 + $0xc] sm:$0xf] %vm350, %v367
        %375 = vst.msk [vmem:[%s370 + $0x10] sm:$0xf] %vm350, %v368
        %376 = vst.msk [vmem:[%s370 + $0x14] sm:$0x1] %vm353, %v369
        %s377 = scalar_lea.vmem [#allocation2], 12
        %v378 = vld [vmem:[%s377] sm:$0xf]
        %v379 = vld [vmem:[%s377 + $0x4] sm:$0xf]
        %v380 = vld [vmem:[%s377 + $0x8] sm:$0x1]
        %v381 = vld [vmem:[%s377 + $0xc] sm:$0xf]
        %v382 = vld [vmem:[%s377 + $0x10] sm:$0xf]
        %v383 = vld [vmem:[%s377 + $0x14] sm:$0x1]
        %v384 = vld [vmem:[%s377 + $0x18] sm:$0xf]
        %v385 = vld [vmem:[%s377 + $0x1c] sm:$0xf]
        %v386 = vld [vmem:[%s377 + $0x20] sm:$0x1]
        %v387 = vld [vmem:[%s377 + $0x24] sm:$0xf]
        %v388 = vld [vmem:[%s377 + $0x28] sm:$0xf]
        %v389 = vld [vmem:[%s377 + $0x2c] sm:$0x1]
        %vm390 = vsmask.f32 3328
        %vm391 = vsmask.f32 7440
        %vm392 = vmor %vm390, %vm391
        %v394 = vshrl.u32 %v378, 16
        %v396 = vrot.slane %v394, 4
        %v397 = vshll.u32 %v378, 16
        %v399 = vrot.slane %v397, 5
        %v400 = vor.u32 %v396, %v399
        %v401 = vrot.slane %v400, 4
        %v403 = vshll.u32 %v379, 16
        %v405 = vrot.slane %v403, 5
        %v406 = vsel %vm392, %v401, %v405
        %v407 = vshrl.u32 %v379, 16
        %v409 = vrot.slane %v407, 4
        %v410 = vor.u32 %v409, %v405
        %v411 = vrot.slane %v410, 4
        %v413 = vshll.u32 %v380, 16
        %v415 = vrot.slane %v413, 5
        %v416 = vsel %vm392, %v411, %v415
        %v418 = vshrl.u32 %v381, 16
        %v420 = vrot.slane %v418, 4
        %v421 = vshll.u32 %v381, 16
        %v423 = vrot.slane %v421, 5
        %v424 = vor.u32 %v420, %v423
        %v425 = vrot.slane %v424, 4
        %v427 = vshll.u32 %v382, 16
        %v429 = vrot.slane %v427, 5
        %v430 = vsel %vm392, %v425, %v429
        %v431 = vshrl.u32 %v382, 16
        %v433 = vrot.slane %v431, 4
        %v434 = vor.u32 %v433, %v429
        %v435 = vrot.slane %v434, 4
        %v437 = vshll.u32 %v383, 16
        %v439 = vrot.slane %v437, 5
        %v440 = vsel %vm392, %v435, %v439
        %v442 = vshrl.u32 %v384, 16
        %v444 = vrot.slane %v442, 4
        %v445 = vshll.u32 %v384, 16
        %v447 = vrot.slane %v445, 5
        %v448 = vor.u32 %v444, %v447
        %v449 = vrot.slane %v448, 4
        %v451 = vshll.u32 %v385, 16
        %v453 = vrot.slane %v451, 5
        %v454 = vsel %vm392, %v449, %v453
        %v455 = vshrl.u32 %v385, 16
        %v457 = vrot.slane %v455, 4
        %v458 = vor.u32 %v457, %v453
        %v459 = vrot.slane %v458, 4
        %v461 = vshll.u32 %v386, 16
        %v463 = vrot.slane %v461, 5
        %v464 = vsel %vm392, %v459, %v463
        %v466 = vshrl.u32 %v387, 16
        %v468 = vrot.slane %v466, 4
        %v469 = vshll.u32 %v387, 16
        %v471 = vrot.slane %v469, 5
        %v472 = vor.u32 %v468, %v471
        %v473 = vrot.slane %v472, 4
        %v475 = vshll.u32 %v388, 16
        %v477 = vrot.slane %v475, 5
        %v478 = vsel %vm392, %v473, %v477
        %v479 = vshrl.u32 %v388, 16
        %v481 = vrot.slane %v479, 4
        %v482 = vor.u32 %v481, %v477
        %v483 = vrot.slane %v482, 4
        %v485 = vshll.u32 %v389, 16
        %v487 = vrot.slane %v485, 5
        %v488 = vsel %vm392, %v483, %v487
        %s489 = scalar_lea.vmem %s2, 8
        %v490 = vld [vmem:[%s489] sm:$0x3]
        %v491 = vunpack.c.l.b16 %v406
        %v492 = vunpack.c.l.b16 %v416
        %v493 = vunpack.c.l.b16 %v430
        %v494 = vunpack.c.l.b16 %v440
        %v495 = vunpack.c.l.b16 %v454
        %v496 = vunpack.c.l.b16 %v464
        %v497 = vunpack.c.l.b16 %v478
        %v498 = vunpack.c.l.b16 %v488
        %v499 = vpack.c.b16 %v492, %v491
        %v500 = vpack.c.b16 %v494, %v493
        %v501 = vpack.c.b16 %v496, %v495
        %v502 = vpack.c.b16 %v498, %v497
        %vm503 = vcmask 31744
        %v505 = vsel %vm503, %v499, 0
        %v508 = vsel %vm503, %v500, 0
        %v511 = vsel %vm503, %v501, 0
        %v514 = vsel %vm503, %v502, 0
        %vm516 = vcmask 1041408
        %v518 = vsel %vm516, %v490, 0
        %520 = vmatprep.subr.bf16.mxu0 0
        %521 = vmatpush1.bf16.msra.mxu0 %v518
        %522 = vmatprep.subr.bf16.mxu0 0
        %523 = vmatpush1.bf16.msra.mxu0 0
        %524 = vmatprep.subr.bf16.mxu0 0
        %525 = vmatpush1.bf16.msra.mxu0 0
        %526 = vmatprep.subr.bf16.mxu0 0
        %527 = vmatpush1.bf16.msra.mxu0 0
        %528 = vmatprep.subr.bf16.mxu0 0
        %529 = vmatpush1.bf16.msra.mxu0 0
        %530 = vmatprep.subr.bf16.mxu0 0
        %531 = vmatpush1.bf16.msra.mxu0 0
        %532 = vmatprep.subr.bf16.mxu0 0
        %533 = vmatpush1.bf16.msra.mxu0 0
        %534 = vmatprep.subr.bf16.mxu0 0
        %535 = vmatpush1.bf16.msra.mxu0 0
        %536 = vmatprep.subr.bf16.mxu0 0
        %537 = vmatpush1.bf16.msra.mxu0 0
        %538 = vmatprep.subr.bf16.mxu0 0
        %539 = vmatpush1.bf16.msra.mxu0 0
        %540 = vmatprep.subr.bf16.mxu0 0
        %541 = vmatpush1.bf16.msra.mxu0 0
        %542 = vmatprep.subr.bf16.mxu0 0
        %543 = vmatpush1.bf16.msra.mxu0 0
        %544 = vmatprep.subr.bf16.mxu0 0
        %545 = vmatpush1.bf16.msra.mxu0 0
        %546 = vmatprep.subr.bf16.mxu0 0
        %547 = vmatpush1.bf16.msra.mxu0 0
        %548 = vmatprep.subr.bf16.mxu0 0
        %549 = vmatpush1.bf16.msra.mxu0 0
        %550 = vmatprep.subr.bf16.mxu0 0
        %551 = vmatpush1.bf16.msra.mxu0 0
        %552 = vmatprep.mubr.bf16.mxu0 0
        %553 = vmatmul.mubr.bf16.gmra.mrb[0].mxu0 %v505
        %v554 = vpop.f32.mrb[0].mxu0
        %v555 = vadd.f32 0.0, %v554
        %v556 = vpop.f32.mrb[0].mxu0
        %v557 = vpop.f32.mrb[0].mxu0
        %v558 = vadd.f32 0.0, %v557
        %v559 = vpop.f32.mrb[0].mxu0
        %560 = vmatprep.mubr.bf16.mxu0 0
        %561 = vmatmul.mubr.bf16.gmra.mrb[0].mxu0 %v508
        %v562 = vpop.f32.mrb[0].mxu0
        %v563 = vadd.f32 0.0, %v562
        %v564 = vpop.f32.mrb[0].mxu0
        %v565 = vpop.f32.mrb[0].mxu0
        %v566 = vadd.f32 0.0, %v565
        %v567 = vpop.f32.mrb[0].mxu0
        %568 = vmatprep.mubr.bf16.mxu0 0
        %569 = vmatmul.mubr.bf16.gmra.mrb[0].mxu0 %v511
        %v570 = vpop.f32.mrb[0].mxu0
        %v571 = vadd.f32 0.0, %v570
        %v572 = vpop.f32.mrb[0].mxu0
        %v573 = vpop.f32.mrb[0].mxu0
        %v574 = vadd.f32 0.0, %v573
        %v575 = vpop.f32.mrb[0].mxu0
        %576 = vmatprep.mubr.bf16.mxu0 0
        %577 = vmatmul.mubr.bf16.gmra.mrb[0].mxu0 %v514
        %v578 = vpop.f32.mrb[0].mxu0
        %v579 = vadd.f32 0.0, %v578
        %v580 = vpop.f32.mrb[0].mxu0
        %v581 = vpop.f32.mrb[0].mxu0
        %v582 = vadd.f32 0.0, %v581
        %v583 = vpop.f32.mrb[0].mxu0
        %584 = vdwg.mxu0
        %v585 = vld [vmem:[%s3] sm:$0x1]
        %v586 = vlaneseq
        %v587 = vshrl.u32 %v586, 7
        %v588 = vsub.s32 0, %v587
        %v589 = vrot.slane %v585, %v588
        %v590 = vadd.f32 %v555, %v589
        %v591 = vadd.f32 %v558, %v589
        %v592 = vadd.f32 %v563, %v589
        %v593 = vadd.f32 %v566, %v589
        %v594 = vadd.f32 %v571, %v589
        %v595 = vadd.f32 %v574, %v589
        %v596 = vadd.f32 %v579, %v589
        %v597 = vadd.f32 %v582, %v589
        %v598 = vld [vmem:[%s4] sm:$0x1]
        %v599 = vld [vmem:[%s5] sm:$0x1]
        %v600 = vld [vmem:[#allocation2] sm:$0xf]
        %v601 = vld [vmem:[#allocation2 + $0x4] sm:$0xf]
        %v602 = vld [vmem:[#allocation2 + $0xc] sm:$0xf]
        %v603 = vld [vmem:[#allocation2 + $0x10] sm:$0xf]
        %v604 = vld [vmem:[#allocation2 + $0x18] sm:$0xf]
        %v605 = vld [vmem:[#allocation2 + $0x1c] sm:$0xf]
        %v606 = vld [vmem:[#allocation2 + $0x24] sm:$0xf]
        %v607 = vld [vmem:[#allocation2 + $0x28] sm:$0xf]
        %v608 = vld [vmem:[%s2] sm:$0x3]
        %v617 = vunpack.c.l.b16 %v600
        %v618 = vunpack.c.l.b16 %v601
        %v619 = vunpack.c.l.b16 %v602
        %v620 = vunpack.c.l.b16 %v603
        %v621 = vunpack.c.l.b16 %v604
        %v622 = vunpack.c.l.b16 %v605
        %v623 = vunpack.c.l.b16 %v606
        %v624 = vunpack.c.l.b16 %v607
        %v625 = vpack.c.b16 %v618, %v617
        %v626 = vpack.c.b16 %v620, %v619
        %v627 = vpack.c.b16 %v622, %v621
        %v628 = vpack.c.b16 %v624, %v623
        %v630 = vsel %vm503, %v625, 0
        %v633 = vsel %vm503, %v626, 0
        %v636 = vsel %vm503, %v627, 0
        %v639 = vsel %vm503, %v628, 0
        %v642 = vsel %vm516, %v608, 0
        %644 = vmatprep.subr.bf16.mxu0 0
        %645 = vmatpush1.bf16.msra.mxu0 %v642
        %646 = vmatprep.subr.bf16.mxu0 0
        %647 = vmatpush1.bf16.msra.mxu0 0
        %648 = vmatprep.subr.bf16.mxu0 0
        %649 = vmatpush1.bf16.msra.mxu0 0
        %650 = vmatprep.subr.bf16.mxu0 0
        %651 = vmatpush1.bf16.msra.mxu0 0
        %652 = vmatprep.subr.bf16.mxu0 0
        %653 = vmatpush1.bf16.msra.mxu0 0
        %654 = vmatprep.subr.bf16.mxu0 0
        %655 = vmatpush1.bf16.msra.mxu0 0
        %656 = vmatprep.subr.bf16.mxu0 0
        %657 = vmatpush1.bf16.msra.mxu0 0
        %658 = vmatprep.subr.bf16.mxu0 0
        %659 = vmatpush1.bf16.msra.mxu0 0
        %660 = vmatprep.subr.bf16.mxu0 0
        %661 = vmatpush1.bf16.msra.mxu0 0
        %662 = vmatprep.subr.bf16.mxu0 0
        %663 = vmatpush1.bf16.msra.mxu0 0
        %664 = vmatprep.subr.bf16.mxu0 0
        %665 = vmatpush1.bf16.msra.mxu0 0
        %666 = vmatprep.subr.bf16.mxu0 0
        %667 = vmatpush1.bf16.msra.mxu0 0
        %668 = vmatprep.subr.bf16.mxu0 0
        %669 = vmatpush1.bf16.msra.mxu0 0
        %670 = vmatprep.subr.bf16.mxu0 0
        %671 = vmatpush1.bf16.msra.mxu0 0
        %672 = vmatprep.subr.bf16.mxu0 0
        %673 = vmatpush1.bf16.msra.mxu0 0
        %674 = vmatprep.subr.bf16.mxu0 0
        %675 = vmatpush1.bf16.msra.mxu0 0
        %676 = vmatprep.mubr.bf16.mxu0 0
        %677 = vmatmul.mubr.bf16.gmra.mrb[0].mxu0 %v630
        %v678 = vpop.f32.mrb[0].mxu0
        %v679 = vadd.f32 0.0, %v678
        %v680 = vpop.f32.mrb[0].mxu0
        %v681 = vpop.f32.mrb[0].mxu0
        %v682 = vadd.f32 0.0, %v681
        %v683 = vpop.f32.mrb[0].mxu0
        %684 = vmatprep.mubr.bf16.mxu0 0
        %685 = vmatmul.mubr.bf16.gmra.mrb[0].mxu0 %v633
        %v686 = vpop.f32.mrb[0].mxu0
        %v687 = vadd.f32 0.0, %v686
        %v688 = vpop.f32.mrb[0].mxu0
        %v689 = vpop.f32.mrb[0].mxu0
        %v690 = vadd.f32 0.0, %v689
        %v691 = vpop.f32.mrb[0].mxu0
        %692 = vmatprep.mubr.bf16.mxu0 0
        %693 = vmatmul.mubr.bf16.gmra.mrb[0].mxu0 %v636
        %v694 = vpop.f32.mrb[0].mxu0
        %v695 = vadd.f32 0.0, %v694
        %v696 = vpop.f32.mrb[0].mxu0
        %v697 = vpop.f32.mrb[0].mxu0
        %v698 = vadd.f32 0.0, %v697
        %v699 = vpop.f32.mrb[0].mxu0
        %700 = vmatprep.mubr.bf16.mxu0 0
        %701 = vmatmul.mubr.bf16.gmra.mrb[0].mxu0 %v639
        %v702 = vpop.f32.mrb[0].mxu0
        %v703 = vadd.f32 0.0, %v702
        %v704 = vpop.f32.mrb[0].mxu0
        %v705 = vpop.f32.mrb[0].mxu0
        %v706 = vadd.f32 0.0, %v705
        %v707 = vpop.f32.mrb[0].mxu0
        %708 = vdwg.mxu0
        %v709 = vadd.f32 %v555, %v679
        %v710 = vadd.f32 %v558, %v682
        %v711 = vadd.f32 %v563, %v687
        %v712 = vadd.f32 %v566, %v690
        %v713 = vadd.f32 %v571, %v695
        %v714 = vadd.f32 %v574, %v698
        %v715 = vadd.f32 %v579, %v703
        %v716 = vadd.f32 %v582, %v706
        %v717 = vld [vmem:[#allocation2] sm:$0xf]
        %v718 = vld [vmem:[#allocation2 + $0x4] sm:$0xf]
        %v719 = vld [vmem:[#allocation2 + $0x8] sm:$0x1]
        %v720 = vld [vmem:[#allocation2 + $0xc] sm:$0xf]
        %v721 = vld [vmem:[#allocation2 + $0x10] sm:$0xf]
        %v722 = vld [vmem:[#allocation2 + $0x14] sm:$0x1]
        %v723 = vld [vmem:[#allocation2 + $0x18] sm:$0xf]
        %v724 = vld [vmem:[#allocation2 + $0x1c] sm:$0xf]
        %v725 = vld [vmem:[#allocation2 + $0x20] sm:$0x1]
        %v726 = vld [vmem:[#allocation2 + $0x24] sm:$0xf]
        %v727 = vld [vmem:[#allocation2 + $0x28] sm:$0xf]
        %v728 = vld [vmem:[#allocation2 + $0x2c] sm:$0x1]
        %v730 = vshrl.u32 %v717, 16
        %v732 = vrot.slane %v730, 4
        %v733 = vshll.u32 %v717, 16
        %v735 = vrot.slane %v733, 5
        %v736 = vor.u32 %v732, %v735
        %v737 = vrot.slane %v736, 4
        %v739 = vshll.u32 %v718, 16
        %v741 = vrot.slane %v739, 5
        %v742 = vsel %vm392, %v737, %v741
        %v743 = vshrl.u32 %v718, 16
        %v745 = vrot.slane %v743, 4
        %v746 = vor.u32 %v745, %v741
        %v747 = vrot.slane %v746, 4
        %v749 = vshll.u32 %v719, 16
        %v751 = vrot.slane %v749, 5
        %v752 = vsel %vm392, %v747, %v751
        %v754 = vshrl.u32 %v720, 16
        %v756 = vrot.slane %v754, 4
        %v757 = vshll.u32 %v720, 16
        %v759 = vrot.slane %v757, 5
        %v760 = vor.u32 %v756, %v759
        %v761 = vrot.slane %v760, 4
        %v763 = vshll.u32 %v721, 16
        %v765 = vrot.slane %v763, 5
        %v766 = vsel %vm392, %v761, %v765
        %v767 = vshrl.u32 %v721, 16
        %v769 = vrot.slane %v767, 4
        %v770 = vor.u32 %v769, %v765
        %v771 = vrot.slane %v770, 4
        %v773 = vshll.u32 %v722, 16
        %v775 = vrot.slane %v773, 5
        %v776 = vsel %vm392, %v771, %v775
        %v778 = vshrl.u32 %v723, 16
        %v780 = vrot.slane %v778, 4
        %v781 = vshll.u32 %v723, 16
        %v783 = vrot.slane %v781, 5
        %v784 = vor.u32 %v780, %v783
        %v785 = vrot.slane %v784, 4
        %v787 = vshll.u32 %v724, 16
        %v789 = vrot.slane %v787, 5
        %v790 = vsel %vm392, %v785, %v789
        %v791 = vshrl.u32 %v724, 16
        %v793 = vrot.slane %v791, 4
        %v794 = vor.u32 %v793, %v789
        %v795 = vrot.slane %v794, 4
        %v797 = vshll.u32 %v725, 16
        %v799 = vrot.slane %v797, 5
        %v800 = vsel %vm392, %v795, %v799
        %v802 = vshrl.u32 %v726, 16
        %v804 = vrot.slane %v802, 4
        %v805 = vshll.u32 %v726, 16
        %v807 = vrot.slane %v805, 5
        %v808 = vor.u32 %v804, %v807
        %v809 = vrot.slane %v808, 4
        %v811 = vshll.u32 %v727, 16
        %v813 = vrot.slane %v811, 5
        %v814 = vsel %vm392, %v809, %v813
        %v815 = vshrl.u32 %v727, 16
        %v817 = vrot.slane %v815, 4
        %v818 = vor.u32 %v817, %v813
        %v819 = vrot.slane %v818, 4
        %v821 = vshll.u32 %v728, 16
        %v823 = vrot.slane %v821, 5
        %v824 = vsel %vm392, %v819, %v823
        %s825 = scalar_lea.vmem %s2, 2
        %v826 = vld [vmem:[%s825] sm:$0x3]
        %v827 = vunpack.c.l.b16 %v742
        %v828 = vunpack.c.l.b16 %v752
        %v829 = vunpack.c.l.b16 %v766
        %v830 = vunpack.c.l.b16 %v776
        %v831 = vunpack.c.l.b16 %v790
        %v832 = vunpack.c.l.b16 %v800
        %v833 = vunpack.c.l.b16 %v814
        %v834 = vunpack.c.l.b16 %v824
        %v835 = vpack.c.b16 %v828, %v827
        %v836 = vpack.c.b16 %v830, %v829
        %v837 = vpack.c.b16 %v832, %v831
        %v838 = vpack.c.b16 %v834, %v833
        %v840 = vsel %vm503, %v835, 0
        %v843 = vsel %vm503, %v836, 0
        %v846 = vsel %vm503, %v837, 0
        %v849 = vsel %vm503, %v838, 0
        %v852 = vsel %vm516, %v826, 0
        %854 = vmatprep.subr.bf16.mxu0 0
        %855 = vmatpush1.bf16.msra.mxu0 %v852
        %856 = vmatprep.subr.bf16.mxu0 0
        %857 = vmatpush1.bf16.msra.mxu0 0
        %858 = vmatprep.subr.bf16.mxu0 0
        %859 = vmatpush1.bf16.msra.mxu0 0
        %860 = vmatprep.subr.bf16.mxu0 0
        %861 = vmatpush1.bf16.msra.mxu0 0
        %862 = vmatprep.subr.bf16.mxu0 0
        %863 = vmatpush1.bf16.msra.mxu0 0
        %864 = vmatprep.subr.bf16.mxu0 0
        %865 = vmatpush1.bf16.msra.mxu0 0
        %866 = vmatprep.subr.bf16.mxu0 0
        %867 = vmatpush1.bf16.msra.mxu0 0
        %868 = vmatprep.subr.bf16.mxu0 0
        %869 = vmatpush1.bf16.msra.mxu0 0
        %870 = vmatprep.subr.bf16.mxu0 0
        %871 = vmatpush1.bf16.msra.mxu0 0
        %872 = vmatprep.subr.bf16.mxu0 0
        %873 = vmatpush1.bf16.msra.mxu0 0
        %874 = vmatprep.subr.bf16.mxu0 0
        %875 = vmatpush1.bf16.msra.mxu0 0
        %876 = vmatprep.subr.bf16.mxu0 0
        %877 = vmatpush1.bf16.msra.mxu0 0
        %878 = vmatprep.subr.bf16.mxu0 0
        %879 = vmatpush1.bf16.msra.mxu0 0
        %880 = vmatprep.subr.bf16.mxu0 0
        %881 = vmatpush1.bf16.msra.mxu0 0
        %882 = vmatprep.subr.bf16.mxu0 0
        %883 = vmatpush1.bf16.msra.mxu0 0
        %884 = vmatprep.subr.bf16.mxu0 0
        %885 = vmatpush1.bf16.msra.mxu0 0
        %886 = vmatprep.mubr.bf16.mxu0 0
        %887 = vmatmul.mubr.bf16.gmra.mrb[0].mxu0 %v840
        %v888 = vpop.f32.mrb[0].mxu0
        %v889 = vadd.f32 0.0, %v888
        %v890 = vpop.f32.mrb[0].mxu0
        %v891 = vpop.f32.mrb[0].mxu0
        %v892 = vadd.f32 0.0, %v891
        %v893 = vpop.f32.mrb[0].mxu0
        %894 = vmatprep.mubr.bf16.mxu0 0
        %895 = vmatmul.mubr.bf16.gmra.mrb[0].mxu0 %v843
        %v896 = vpop.f32.mrb[0].mxu0
        %v897 = vadd.f32 0.0, %v896
        %v898 = vpop.f32.mrb[0].mxu0
        %v899 = vpop.f32.mrb[0].mxu0
        %v900 = vadd.f32 0.0, %v899
        %v901 = vpop.f32.mrb[0].mxu0
        %902 = vmatprep.mubr.bf16.mxu0 0
        %903 = vmatmul.mubr.bf16.gmra.mrb[0].mxu0 %v846
        %v904 = vpop.f32.mrb[0].mxu0
        %v905 = vadd.f32 0.0, %v904
        %v906 = vpop.f32.mrb[0].mxu0
        %v907 = vpop.f32.mrb[0].mxu0
        %v908 = vadd.f32 0.0, %v907
        %v909 = vpop.f32.mrb[0].mxu0
        %910 = vmatprep.mubr.bf16.mxu0 0
        %911 = vmatmul.mubr.bf16.gmra.mrb[0].mxu0 %v849
        %v912 = vpop.f32.mrb[0].mxu0
        %v913 = vadd.f32 0.0, %v912
        %v914 = vpop.f32.mrb[0].mxu0
        %v915 = vpop.f32.mrb[0].mxu0
        %v916 = vadd.f32 0.0, %v915
        %v917 = vpop.f32.mrb[0].mxu0
        %918 = vdwg.mxu0
        %v919 = vadd.f32 %v709, %v889
        %v920 = vadd.f32 %v710, %v892
        %v921 = vadd.f32 %v711, %v897
        %v922 = vadd.f32 %v712, %v900
        %v923 = vadd.f32 %v713, %v905
        %v924 = vadd.f32 %v714, %v908
        %v925 = vadd.f32 %v715, %v913
        %v926 = vadd.f32 %v716, %v916
        %v927 = vld [vmem:[#allocation2] sm:$0xe]
        %v928 = vld [vmem:[#allocation2 + $0xc] sm:$0xe]
        %v929 = vld [vmem:[#allocation2 + $0x18] sm:$0xe]
        %v930 = vld [vmem:[#allocation2 + $0x24] sm:$0xe]
        %vm943 = vcmask 1042432
        %vm944 = vcmask 1046532
        %vm945 = vmor %vm943, %vm944
        %v946 = vrot.slane %v927, 5
        %v947 = vrot.slane %v946, 4
        %v948 = vrot.slane %v718, 5
        %v949 = vsel %vm945, %v947, %v948
        %v950 = vrot.slane %v948, 4
        %v951 = vrot.slane %v719, 5
        %v952 = vsel %vm945, %v950, %v951
        %v953 = vrot.slane %v928, 5
        %v954 = vrot.slane %v953, 4
        %v955 = vrot.slane %v721, 5
        %v956 = vsel %vm945, %v954, %v955
        %v957 = vrot.slane %v955, 4
        %v958 = vrot.slane %v722, 5
        %v959 = vsel %vm945, %v957, %v958
        %v960 = vrot.slane %v929, 5
        %v961 = vrot.slane %v960, 4
        %v962 = vrot.slane %v724, 5
        %v963 = vsel %vm945, %v961, %v962
        %v964 = vrot.slane %v962, 4
        %v965 = vrot.slane %v725, 5
        %v966 = vsel %vm945, %v964, %v965
        %v967 = vrot.slane %v930, 5
        %v968 = vrot.slane %v967, 4
        %v969 = vrot.slane %v727, 5
        %v970 = vsel %vm945, %v968, %v969
        %v971 = vrot.slane %v969, 4
        %v972 = vrot.slane %v728, 5
        %v973 = vsel %vm945, %v971, %v972
        %s974 = scalar_lea.vmem %s2, 4
        %v975 = vld [vmem:[%s974] sm:$0x3]
        %v976 = vunpack.c.l.b16 %v949
        %v977 = vunpack.c.l.b16 %v952
        %v978 = vunpack.c.l.b16 %v956
        %v979 = vunpack.c.l.b16 %v959
        %v980 = vunpack.c.l.b16 %v963
        %v981 = vunpack.c.l.b16 %v966
        %v982 = vunpack.c.l.b16 %v970
        %v983 = vunpack.c.l.b16 %v973
        %v984 = vpack.c.b16 %v977, %v976
        %v985 = vpack.c.b16 %v979, %v978
        %v986 = vpack.c.b16 %v981, %v980
        %v987 = vpack.c.b16 %v983, %v982
        %v989 = vsel %vm503, %v984, 0
        %v992 = vsel %vm503, %v985, 0
        %v995 = vsel %vm503, %v986, 0
        %v998 = vsel %vm503, %v987, 0
        %v1001 = vsel %vm516, %v975, 0
        %1003 = vmatprep.subr.bf16.mxu0 0
        %1004 = vmatpush1.bf16.msra.mxu0 %v1001
        %1005 = vmatprep.subr.bf16.mxu0 0
        %1006 = vmatpush1.bf16.msra.mxu0 0
        %1007 = vmatprep.subr.bf16.mxu0 0
        %1008 = vmatpush1.bf16.msra.mxu0 0
        %1009 = vmatprep.subr.bf16.mxu0 0
        %1010 = vmatpush1.bf16.msra.mxu0 0
        %1011 = vmatprep.subr.bf16.mxu0 0
        %1012 = vmatpush1.bf16.msra.mxu0 0
        %1013 = vmatprep.subr.bf16.mxu0 0
        %1014 = vmatpush1.bf16.msra.mxu0 0
        %1015 = vmatprep.subr.bf16.mxu0 0
        %1016 = vmatpush1.bf16.msra.mxu0 0
        %1017 = vmatprep.subr.bf16.mxu0 0
        %1018 = vmatpush1.bf16.msra.mxu0 0
        %1019 = vmatprep.subr.bf16.mxu0 0
        %1020 = vmatpush1.bf16.msra.mxu0 0
        %1021 = vmatprep.subr.bf16.mxu0 0
        %1022 = vmatpush1.bf16.msra.mxu0 0
        %1023 = vmatprep.subr.bf16.mxu0 0
        %1024 = vmatpush1.bf16.msra.mxu0 0
        %1025 = vmatprep.subr.bf16.mxu0 0
        %1026 = vmatpush1.bf16.msra.mxu0 0
        %1027 = vmatprep.subr.bf16.mxu0 0
        %1028 = vmatpush1.bf16.msra.mxu0 0
        %1029 = vmatprep.subr.bf16.mxu0 0
        %1030 = vmatpush1.bf16.msra.mxu0 0
        %1031 = vmatprep.subr.bf16.mxu0 0
        %1032 = vmatpush1.bf16.msra.mxu0 0
        %1033 = vmatprep.subr.bf16.mxu0 0
        %1034 = vmatpush1.bf16.msra.mxu0 0
        %1035 = vmatprep.mubr.bf16.mxu0 0
        %1036 = vmatmul.mubr.bf16.gmra.mrb[0].mxu0 %v989
        %v1037 = vpop.f32.mrb[0].mxu0
        %v1038 = vadd.f32 0.0, %v1037
        %v1039 = vpop.f32.mrb[0].mxu0
        %v1040 = vpop.f32.mrb[0].mxu0
        %v1041 = vadd.f32 0.0, %v1040
        %v1042 = vpop.f32.mrb[0].mxu0
        %1043 = vmatprep.mubr.bf16.mxu0 0
        %1044 = vmatmul.mubr.bf16.gmra.mrb[0].mxu0 %v992
        %v1045 = vpop.f32.mrb[0].mxu0
        %v1046 = vadd.f32 0.0, %v1045
        %v1047 = vpop.f32.mrb[0].mxu0
        %v1048 = vpop.f32.mrb[0].mxu0
        %v1049 = vadd.f32 0.0, %v1048
        %v1050 = vpop.f32.mrb[0].mxu0
        %1051 = vmatprep.mubr.bf16.mxu0 0
        %1052 = vmatmul.mubr.bf16.gmra.mrb[0].mxu0 %v995
        %v1053 = vpop.f32.mrb[0].mxu0
        %v1054 = vadd.f32 0.0, %v1053
        %v1055 = vpop.f32.mrb[0].mxu0
        %v1056 = vpop.f32.mrb[0].mxu0
        %v1057 = vadd.f32 0.0, %v1056
        %v1058 = vpop.f32.mrb[0].mxu0
        %1059 = vmatprep.mubr.bf16.mxu0 0
        %1060 = vmatmul.mubr.bf16.gmra.mrb[0].mxu0 %v998
        %v1061 = vpop.f32.mrb[0].mxu0
        %v1062 = vadd.f32 0.0, %v1061
        %v1063 = vpop.f32.mrb[0].mxu0
        %v1064 = vpop.f32.mrb[0].mxu0
        %v1065 = vadd.f32 0.0, %v1064
        %v1066 = vpop.f32.mrb[0].mxu0
        %1067 = vdwg.mxu0
        %v1068 = vadd.f32 %v919, %v1038
        %v1069 = vadd.f32 %v920, %v1041
        %v1070 = vadd.f32 %v921, %v1046
        %v1071 = vadd.f32 %v922, %v1049
        %v1072 = vadd.f32 %v923, %v1054
        %v1073 = vadd.f32 %v924, %v1057
        %v1074 = vadd.f32 %v925, %v1062
        %v1075 = vadd.f32 %v926, %v1065
        %v1076 = vld [vmem:[%s377] sm:$0xf]
        %v1077 = vld [vmem:[%s377 + $0x4] sm:$0xf]
        %v1078 = vld [vmem:[%s377 + $0xc] sm:$0xf]
        %v1079 = vld [vmem:[%s377 + $0x10] sm:$0xf]
        %v1080 = vld [vmem:[%s377 + $0x18] sm:$0xf]
        %v1081 = vld [vmem:[%s377 + $0x1c] sm:$0xf]
        %v1082 = vld [vmem:[%s377 + $0x24] sm:$0xf]
        %v1083 = vld [vmem:[%s377 + $0x28] sm:$0xf]
        %s1084 = scalar_lea.vmem %s2, 6
        %v1085 = vld [vmem:[%s1084] sm:$0x3]
        %v1094 = vunpack.c.l.b16 %v1076
        %v1095 = vunpack.c.l.b16 %v1077
        %v1096 = vunpack.c.l.b16 %v1078
        %v1097 = vunpack.c.l.b16 %v1079
        %v1098 = vunpack.c.l.b16 %v1080
        %v1099 = vunpack.c.l.b16 %v1081
        %v1100 = vunpack.c.l.b16 %v1082
        %v1101 = vunpack.c.l.b16 %v1083
        %v1102 = vpack.c.b16 %v1095, %v1094
        %v1103 = vpack.c.b16 %v1097, %v1096
        %v1104 = vpack.c.b16 %v1099, %v1098
        %v1105 = vpack.c.b16 %v1101, %v1100
        %v1107 = vsel %vm503, %v1102, 0
        %v1110 = vsel %vm503, %v1103, 0
        %v1113 = vsel %vm503, %v1104, 0
        %v1116 = vsel %vm503, %v1105, 0
        %v1119 = vsel %vm516, %v1085, 0
        %1121 = vmatprep.subr.bf16.mxu0 0
        %1122 = vmatpush1.bf16.msra.mxu0 %v1119
        %1123 = vmatprep.subr.bf16.mxu0 0
        %1124 = vmatpush1.bf16.msra.mxu0 0
        %1125 = vmatprep.subr.bf16.mxu0 0
        %1126 = vmatpush1.bf16.msra.mxu0 0
        %1127 = vmatprep.subr.bf16.mxu0 0
        %1128 = vmatpush1.bf16.msra.mxu0 0
        %1129 = vmatprep.subr.bf16.mxu0 0
        %1130 = vmatpush1.bf16.msra.mxu0 0
        %1131 = vmatprep.subr.bf16.mxu0 0
        %1132 = vmatpush1.bf16.msra.mxu0 0
        %1133 = vmatprep.subr.bf16.mxu0 0
        %1134 = vmatpush1.bf16.msra.mxu0 0
        %1135 = vmatprep.subr.bf16.mxu0 0
        %1136 = vmatpush1.bf16.msra.mxu0 0
        %1137 = vmatprep.subr.bf16.mxu0 0
        %1138 = vmatpush1.bf16.msra.mxu0 0
        %1139 = vmatprep.subr.bf16.mxu0 0
        %1140 = vmatpush1.bf16.msra.mxu0 0
        %1141 = vmatprep.subr.bf16.mxu0 0
        %1142 = vmatpush1.bf16.msra.mxu0 0
        %1143 = vmatprep.subr.bf16.mxu0 0
        %1144 = vmatpush1.bf16.msra.mxu0 0
        %1145 = vmatprep.subr.bf16.mxu0 0
        %1146 = vmatpush1.bf16.msra.mxu0 0
        %1147 = vmatprep.subr.bf16.mxu0 0
        %1148 = vmatpush1.bf16.msra.mxu0 0
        %1149 = vmatprep.subr.bf16.mxu0 0
        %1150 = vmatpush1.bf16.msra.mxu0 0
        %1151 = vmatprep.subr.bf16.mxu0 0
        %1152 = vmatpush1.bf16.msra.mxu0 0
        %1153 = vmatprep.mubr.bf16.mxu0 0
        %1154 = vmatmul.mubr.bf16.gmra.mrb[0].mxu0 %v1107
        %v1155 = vpop.f32.mrb[0].mxu0
        %v1156 = vadd.f32 0.0, %v1155
        %v1157 = vpop.f32.mrb[0].mxu0
        %v1158 = vpop.f32.mrb[0].mxu0
        %v1159 = vadd.f32 0.0, %v1158
        %v1160 = vpop.f32.mrb[0].mxu0
        %1161 = vmatprep.mubr.bf16.mxu0 0
        %1162 = vmatmul.mubr.bf16.gmra.mrb[0].mxu0 %v1110
        %v1163 = vpop.f32.mrb[0].mxu0
        %v1164 = vadd.f32 0.0, %v1163
        %v1165 = vpop.f32.mrb[0].mxu0
        %v1166 = vpop.f32.mrb[0].mxu0
        %v1167 = vadd.f32 0.0, %v1166
        %v1168 = vpop.f32.mrb[0].mxu0
        %1169 = vmatprep.mubr.bf16.mxu0 0
        %1170 = vmatmul.mubr.bf16.gmra.mrb[0].mxu0 %v1113
        %v1171 = vpop.f32.mrb[0].mxu0
        %v1172 = vadd.f32 0.0, %v1171
        %v1173 = vpop.f32.mrb[0].mxu0
        %v1174 = vpop.f32.mrb[0].mxu0
        %v1175 = vadd.f32 0.0, %v1174
        %v1176 = vpop.f32.mrb[0].mxu0
        %1177 = vmatprep.mubr.bf16.mxu0 0
        %1178 = vmatmul.mubr.bf16.gmra.mrb[0].mxu0 %v1116
        %v1179 = vpop.f32.mrb[0].mxu0
        %v1180 = vadd.f32 0.0, %v1179
        %v1181 = vpop.f32.mrb[0].mxu0
        %v1182 = vpop.f32.mrb[0].mxu0
        %v1183 = vadd.f32 0.0, %v1182
        %v1184 = vpop.f32.mrb[0].mxu0
        %1185 = vdwg.mxu0
        %v1186 = vadd.f32 %v1068, %v1156
        %v1187 = vadd.f32 %v1069, %v1159
        %v1188 = vadd.f32 %v1070, %v1164
        %v1189 = vadd.f32 %v1071, %v1167
        %v1190 = vadd.f32 %v1072, %v1172
        %v1191 = vadd.f32 %v1073, %v1175
        %v1192 = vadd.f32 %v1074, %v1180
        %v1193 = vadd.f32 %v1075, %v1183
        %v1194 = vld [vmem:[%s377] sm:$0xe]
        %v1195 = vld [vmem:[%s377 + $0xc] sm:$0xe]
        %v1196 = vld [vmem:[%s377 + $0x18] sm:$0xe]
        %v1197 = vld [vmem:[%s377 + $0x24] sm:$0xe]
        %v1210 = vrot.slane %v1194, 5
        %v1211 = vrot.slane %v1210, 4
        %v1212 = vrot.slane %v379, 5
        %v1213 = vsel %vm945, %v1211, %v1212
        %v1214 = vrot.slane %v1212, 4
        %v1215 = vrot.slane %v380, 5
        %v1216 = vsel %vm945, %v1214, %v1215
        %v1217 = vrot.slane %v1195, 5
        %v1218 = vrot.slane %v1217, 4
        %v1219 = vrot.slane %v382, 5
        %v1220 = vsel %vm945, %v1218, %v1219
        %v1221 = vrot.slane %v1219, 4
        %v1222 = vrot.slane %v383, 5
        %v1223 = vsel %vm945, %v1221, %v1222
        %v1224 = vrot.slane %v1196, 5
        %v1225 = vrot.slane %v1224, 4
        %v1226 = vrot.slane %v385, 5
        %v1227 = vsel %vm945, %v1225, %v1226
        %v1228 = vrot.slane %v1226, 4
        %v1229 = vrot.slane %v386, 5
        %v1230 = vsel %vm945, %v1228, %v1229
        %v1231 = vrot.slane %v1197, 5
        %v1232 = vrot.slane %v1231, 4
        %v1233 = vrot.slane %v388, 5
        %v1234 = vsel %vm945, %v1232, %v1233
        %v1235 = vrot.slane %v1233, 4
        %v1236 = vrot.slane %v389, 5
        %v1237 = vsel %vm945, %v1235, %v1236
        %s1238 = scalar_lea.vmem %s2, 10
        %v1239 = vld [vmem:[%s1238] sm:$0x3]
        %v1240 = vunpack.c.l.b16 %v1213
        %v1241 = vunpack.c.l.b16 %v1216
        %v1242 = vunpack.c.l.b16 %v1220
        %v1243 = vunpack.c.l.b16 %v1223
        %v1244 = vunpack.c.l.b16 %v1227
        %v1245 = vunpack.c.l.b16 %v1230
        %v1246 = vunpack.c.l.b16 %v1234
        %v1247 = vunpack.c.l.b16 %v1237
        %v1248 = vpack.c.b16 %v1241, %v1240
        %v1249 = vpack.c.b16 %v1243, %v1242
        %v1250 = vpack.c.b16 %v1245, %v1244
        %v1251 = vpack.c.b16 %v1247, %v1246
        %v1253 = vsel %vm503, %v1248, 0
        %v1256 = vsel %vm503, %v1249, 0
        %v1259 = vsel %vm503, %v1250, 0
        %v1262 = vsel %vm503, %v1251, 0
        %v1265 = vsel %vm516, %v1239, 0
        %1267 = vmatprep.subr.bf16.mxu0 0
        %1268 = vmatpush1.bf16.msra.mxu0 %v1265
        %1269 = vmatprep.subr.bf16.mxu0 0
        %1270 = vmatpush1.bf16.msra.mxu0 0
        %1271 = vmatprep.subr.bf16.mxu0 0
        %1272 = vmatpush1.bf16.msra.mxu0 0
        %1273 = vmatprep.subr.bf16.mxu0 0
        %1274 = vmatpush1.bf16.msra.mxu0 0
        %1275 = vmatprep.subr.bf16.mxu0 0
        %1276 = vmatpush1.bf16.msra.mxu0 0
        %1277 = vmatprep.subr.bf16.mxu0 0
        %1278 = vmatpush1.bf16.msra.mxu0 0
        %1279 = vmatprep.subr.bf16.mxu0 0
        %1280 = vmatpush1.bf16.msra.mxu0 0
        %1281 = vmatprep.subr.bf16.mxu0 0
        %1282 = vmatpush1.bf16.msra.mxu0 0
        %1283 = vmatprep.subr.bf16.mxu0 0
        %1284 = vmatpush1.bf16.msra.mxu0 0
        %1285 = vmatprep.subr.bf16.mxu0 0
        %1286 = vmatpush1.bf16.msra.mxu0 0
        %1287 = vmatprep.subr.bf16.mxu0 0
        %1288 = vmatpush1.bf16.msra.mxu0 0
        %1289 = vmatprep.subr.bf16.mxu0 0
        %1290 = vmatpush1.bf16.msra.mxu0 0
        %1291 = vmatprep.subr.bf16.mxu0 0
        %1292 = vmatpush1.bf16.msra.mxu0 0
        %1293 = vmatprep.subr.bf16.mxu0 0
        %1294 = vmatpush1.bf16.msra.mxu0 0
        %1295 = vmatprep.subr.bf16.mxu0 0
        %1296 = vmatpush1.bf16.msra.mxu0 0
        %1297 = vmatprep.subr.bf16.mxu0 0
        %1298 = vmatpush1.bf16.msra.mxu0 0
        %1299 = vmatprep.mubr.bf16.mxu0 0
        %1300 = vmatmul.mubr.bf16.gmra.mrb[0].mxu0 %v1253
        %v1301 = vpop.f32.mrb[0].mxu0
        %v1302 = vadd.f32 0.0, %v1301
        %v1303 = vpop.f32.mrb[0].mxu0
        %v1304 = vpop.f32.mrb[0].mxu0
        %v1305 = vadd.f32 0.0, %v1304
        %v1306 = vpop.f32.mrb[0].mxu0
        %1307 = vmatprep.mubr.bf16.mxu0 0
        %1308 = vmatmul.mubr.bf16.gmra.mrb[0].mxu0 %v1256
        %v1309 = vpop.f32.mrb[0].mxu0
        %v1310 = vadd.f32 0.0, %v1309
        %v1311 = vpop.f32.mrb[0].mxu0
        %v1312 = vpop.f32.mrb[0].mxu0
        %v1313 = vadd.f32 0.0, %v1312
        %v1314 = vpop.f32.mrb[0].mxu0
        %1315 = vmatprep.mubr.bf16.mxu0 0
        %1316 = vmatmul.mubr.bf16.gmra.mrb[0].mxu0 %v1259
        %v1317 = vpop.f32.mrb[0].mxu0
        %v1318 = vadd.f32 0.0, %v1317
        %v1319 = vpop.f32.mrb[0].mxu0
        %v1320 = vpop.f32.mrb[0].mxu0
        %v1321 = vadd.f32 0.0, %v1320
        %v1322 = vpop.f32.mrb[0].mxu0
        %1323 = vmatprep.mubr.bf16.mxu0 0
        %1324 = vmatmul.mubr.bf16.gmra.mrb[0].mxu0 %v1262
        %v1325 = vpop.f32.mrb[0].mxu0
        %v1326 = vadd.f32 0.0, %v1325
        %v1327 = vpop.f32.mrb[0].mxu0
        %v1328 = vpop.f32.mrb[0].mxu0
        %v1329 = vadd.f32 0.0, %v1328
        %v1330 = vpop.f32.mrb[0].mxu0
        %1331 = vdwg.mxu0
        %v1332 = vadd.f32 %v1186, %v1302
        %v1333 = vadd.f32 %v1187, %v1305
        %v1334 = vadd.f32 %v1188, %v1310
        %v1335 = vadd.f32 %v1189, %v1313
        %v1336 = vadd.f32 %v1190, %v1318
        %v1337 = vadd.f32 %v1191, %v1321
        %v1338 = vadd.f32 %v1192, %v1326
        %v1339 = vadd.f32 %v1193, %v1329
        %s1340 = scalar_lea.vmem [#allocation2], 24
        %v1341 = vld [vmem:[%s1340] sm:$0xf]
        %v1342 = vld [vmem:[%s1340 + $0x4] sm:$0xf]
        %v1343 = vld [vmem:[%s1340 + $0xc] sm:$0xf]
        %v1344 = vld [vmem:[%s1340 + $0x10] sm:$0xf]
        %v1345 = vld [vmem:[%s1340 + $0x18] sm:$0xf]
        %v1346 = vld [vmem:[%s1340 + $0x1c] sm:$0xf]
        %v1347 = vld [vmem:[%s1340 + $0x24] sm:$0xf]
        %v1348 = vld [vmem:[%s1340 + $0x28] sm:$0xf]
        %s1349 = scalar_lea.vmem %s2, 12
        %v1350 = vld [vmem:[%s1349] sm:$0x3]
        %v1359 = vunpack.c.l.b16 %v1341
        %v1360 = vunpack.c.l.b16 %v1342
        %v1361 = vunpack.c.l.b16 %v1343
        %v1362 = vunpack.c.l.b16 %v1344
        %v1363 = vunpack.c.l.b16 %v1345
        %v1364 = vunpack.c.l.b16 %v1346
        %v1365 = vunpack.c.l.b16 %v1347
        %v1366 = vunpack.c.l.b16 %v1348
        %v1367 = vpack.c.b16 %v1360, %v1359
        %v1368 = vpack.c.b16 %v1362, %v1361
        %v1369 = vpack.c.b16 %v1364, %v1363
        %v1370 = vpack.c.b16 %v1366, %v1365
        %v1372 = vsel %vm503, %v1367, 0
        %v1375 = vsel %vm503, %v1368, 0
        %v1378 = vsel %vm503, %v1369, 0
        %v1381 = vsel %vm503, %v1370, 0
        %v1384 = vsel %vm516, %v1350, 0
        %1386 = vmatprep.subr.bf16.mxu0 0
        %1387 = vmatpush1.bf16.msra.mxu0 %v1384
        %1388 = vmatprep.subr.bf16.mxu0 0
        %1389 = vmatpush1.bf16.msra.mxu0 0
        %1390 = vmatprep.subr.bf16.mxu0 0
        %1391 = vmatpush1.bf16.msra.mxu0 0
        %1392 = vmatprep.subr.bf16.mxu0 0
        %1393 = vmatpush1.bf16.msra.mxu0 0
        %1394 = vmatprep.subr.bf16.mxu0 0
        %1395 = vmatpush1.bf16.msra.mxu0 0
        %1396 = vmatprep.subr.bf16.mxu0 0
        %1397 = vmatpush1.bf16.msra.mxu0 0
        %1398 = vmatprep.subr.bf16.mxu0 0
        %1399 = vmatpush1.bf16.msra.mxu0 0
        %1400 = vmatprep.subr.bf16.mxu0 0
        %1401 = vmatpush1.bf16.msra.mxu0 0
        %1402 = vmatprep.subr.bf16.mxu0 0
        %1403 = vmatpush1.bf16.msra.mxu0 0
        %1404 = vmatprep.subr.bf16.mxu0 0
        %1405 = vmatpush1.bf16.msra.mxu0 0
        %1406 = vmatprep.subr.bf16.mxu0 0
        %1407 = vmatpush1.bf16.msra.mxu0 0
        %1408 = vmatprep.subr.bf16.mxu0 0
        %1409 = vmatpush1.bf16.msra.mxu0 0
        %1410 = vmatprep.subr.bf16.mxu0 0
        %1411 = vmatpush1.bf16.msra.mxu0 0
        %1412 = vmatprep.subr.bf16.mxu0 0
        %1413 = vmatpush1.bf16.msra.mxu0 0
        %1414 = vmatprep.subr.bf16.mxu0 0
        %1415 = vmatpush1.bf16.msra.mxu0 0
        %1416 = vmatprep.subr.bf16.mxu0 0
        %1417 = vmatpush1.bf16.msra.mxu0 0
        %1418 = vmatprep.mubr.bf16.mxu0 0
        %1419 = vmatmul.mubr.bf16.gmra.mrb[0].mxu0 %v1372
        %v1420 = vpop.f32.mrb[0].mxu0
        %v1421 = vadd.f32 0.0, %v1420
        %v1422 = vpop.f32.mrb[0].mxu0
        %v1423 = vpop.f32.mrb[0].mxu0
        %v1424 = vadd.f32 0.0, %v1423
        %v1425 = vpop.f32.mrb[0].mxu0
        %1426 = vmatprep.mubr.bf16.mxu0 0
        %1427 = vmatmul.mubr.bf16.gmra.mrb[0].mxu0 %v1375
        %v1428 = vpop.f32.mrb[0].mxu0
        %v1429 = vadd.f32 0.0, %v1428
        %v1430 = vpop.f32.mrb[0].mxu0
        %v1431 = vpop.f32.mrb[0].mxu0
        %v1432 = vadd.f32 0.0, %v1431
        %v1433 = vpop.f32.mrb[0].mxu0
        %1434 = vmatprep.mubr.bf16.mxu0 0
        %1435 = vmatmul.mubr.bf16.gmra.mrb[0].mxu0 %v1378
        %v1436 = vpop.f32.mrb[0].mxu0
        %v1437 = vadd.f32 0.0, %v1436
        %v1438 = vpop.f32.mrb[0].mxu0
        %v1439 = vpop.f32.mrb[0].mxu0
        %v1440 = vadd.f32 0.0, %v1439
        %v1441 = vpop.f32.mrb[0].mxu0
        %1442 = vmatprep.mubr.bf16.mxu0 0
        %1443 = vmatmul.mubr.bf16.gmra.mrb[0].mxu0 %v1381
        %v1444 = vpop.f32.mrb[0].mxu0
        %v1445 = vadd.f32 0.0, %v1444
        %v1446 = vpop.f32.mrb[0].mxu0
        %v1447 = vpop.f32.mrb[0].mxu0
        %v1448 = vadd.f32 0.0, %v1447
        %v1449 = vpop.f32.mrb[0].mxu0
        %1450 = vdwg.mxu0
        %v1451 = vadd.f32 %v1332, %v1421
        %v1452 = vadd.f32 %v1333, %v1424
        %v1453 = vadd.f32 %v1334, %v1429
        %v1454 = vadd.f32 %v1335, %v1432
        %v1455 = vadd.f32 %v1336, %v1437
        %v1456 = vadd.f32 %v1337, %v1440
        %v1457 = vadd.f32 %v1338, %v1445
        %v1458 = vadd.f32 %v1339, %v1448
        %v1459 = vld [vmem:[%s1340] sm:$0xf]
        %v1460 = vld [vmem:[%s1340 + $0x4] sm:$0xf]
        %v1461 = vld [vmem:[%s1340 + $0x8] sm:$0x1]
        %v1462 = vld [vmem:[%s1340 + $0xc] sm:$0xf]
        %v1463 = vld [vmem:[%s1340 + $0x10] sm:$0xf]
        %v1464 = vld [vmem:[%s1340 + $0x14] sm:$0x1]
        %v1465 = vld [vmem:[%s1340 + $0x18] sm:$0xf]
        %v1466 = vld [vmem:[%s1340 + $0x1c] sm:$0xf]
        %v1467 = vld [vmem:[%s1340 + $0x20] sm:$0x1]
        %v1468 = vld [vmem:[%s1340 + $0x24] sm:$0xf]
        %v1469 = vld [vmem:[%s1340 + $0x28] sm:$0xf]
        %v1470 = vld [vmem:[%s1340 + $0x2c] sm:$0x1]
        %v1472 = vshrl.u32 %v1459, 16
        %v1474 = vrot.slane %v1472, 4
        %v1475 = vshll.u32 %v1459, 16
        %v1477 = vrot.slane %v1475, 5
        %v1478 = vor.u32 %v1474, %v1477
        %v1479 = vrot.slane %v1478, 4
        %v1481 = vshll.u32 %v1460, 16
        %v1483 = vrot.slane %v1481, 5
        %v1484 = vsel %vm392, %v1479, %v1483
        %v1485 = vshrl.u32 %v1460, 16
        %v1487 = vrot.slane %v1485, 4
        %v1488 = vor.u32 %v1487, %v1483
        %v1489 = vrot.slane %v1488, 4
        %v1491 = vshll.u32 %v1461, 16
        %v1493 = vrot.slane %v1491, 5
        %v1494 = vsel %vm392, %v1489, %v1493
        %v1496 = vshrl.u32 %v1462, 16
        %v1498 = vrot.slane %v1496, 4
        %v1499 = vshll.u32 %v1462, 16
        %v1501 = vrot.slane %v1499, 5
        %v1502 = vor.u32 %v1498, %v1501
        %v1503 = vrot.slane %v1502, 4
        %v1505 = vshll.u32 %v1463, 16
        %v1507 = vrot.slane %v1505, 5
        %v1508 = vsel %vm392, %v1503, %v1507
        %v1509 = vshrl.u32 %v1463, 16
        %v1511 = vrot.slane %v1509, 4
        %v1512 = vor.u32 %v1511, %v1507
        %v1513 = vrot.slane %v1512, 4
        %v1515 = vshll.u32 %v1464, 16
        %v1517 = vrot.slane %v1515, 5
        %v1518 = vsel %vm392, %v1513, %v1517
        %v1520 = vshrl.u32 %v1465, 16
        %v1522 = vrot.slane %v1520, 4
        %v1523 = vshll.u32 %v1465, 16
        %v1525 = vrot.slane %v1523, 5
        %v1526 = vor.u32 %v1522, %v1525
        %v1527 = vrot.slane %v1526, 4
        %v1529 = vshll.u32 %v1466, 16
        %v1531 = vrot.slane %v1529, 5
        %v1532 = vsel %vm392, %v1527, %v1531
        %v1533 = vshrl.u32 %v1466, 16
        %v1535 = vrot.slane %v1533, 4
        %v1536 = vor.u32 %v1535, %v1531
        %v1537 = vrot.slane %v1536, 4
        %v1539 = vshll.u32 %v1467, 16
        %v1541 = vrot.slane %v1539, 5
        %v1542 = vsel %vm392, %v1537, %v1541
        %v1544 = vshrl.u32 %v1468, 16
        %v1546 = vrot.slane %v1544, 4
        %v1547 = vshll.u32 %v1468, 16
        %v1549 = vrot.slane %v1547, 5
        %v1550 = vor.u32 %v1546, %v1549
        %v1551 = vrot.slane %v1550, 4
        %v1553 = vshll.u32 %v1469, 16
        %v1555 = vrot.slane %v1553, 5
        %v1556 = vsel %vm392, %v1551, %v1555
        %v1557 = vshrl.u32 %v1469, 16
        %v1559 = vrot.slane %v1557, 4
        %v1560 = vor.u32 %v1559, %v1555
        %v1561 = vrot.slane %v1560, 4
        %v1563 = vshll.u32 %v1470, 16
        %v1565 = vrot.slane %v1563, 5
        %v1566 = vsel %vm392, %v1561, %v1565
        %s1567 = scalar_lea.vmem %s2, 14
        %v1568 = vld [vmem:[%s1567] sm:$0x3]
        %v1569 = vunpack.c.l.b16 %v1484
        %v1570 = vunpack.c.l.b16 %v1494
        %v1571 = vunpack.c.l.b16 %v1508
        %v1572 = vunpack.c.l.b16 %v1518
        %v1573 = vunpack.c.l.b16 %v1532
        %v1574 = vunpack.c.l.b16 %v1542
        %v1575 = vunpack.c.l.b16 %v1556
        %v1576 = vunpack.c.l.b16 %v1566
        %v1577 = vpack.c.b16 %v1570, %v1569
        %v1578 = vpack.c.b16 %v1572, %v1571
        %v1579 = vpack.c.b16 %v1574, %v1573
        %v1580 = vpack.c.b16 %v1576, %v1575
        %v1582 = vsel %vm503, %v1577, 0
        %v1585 = vsel %vm503, %v1578, 0
        %v1588 = vsel %vm503, %v1579, 0
        %v1591 = vsel %vm503, %v1580, 0
        %v1594 = vsel %vm516, %v1568, 0
        %1596 = vmatprep.subr.bf16.mxu0 0
        %1597 = vmatpush1.bf16.msra.mxu0 %v1594
        %1598 = vmatprep.subr.bf16.mxu0 0
        %1599 = vmatpush1.bf16.msra.mxu0 0
        %1600 = vmatprep.subr.bf16.mxu0 0
        %1601 = vmatpush1.bf16.msra.mxu0 0
        %1602 = vmatprep.subr.bf16.mxu0 0
        %1603 = vmatpush1.bf16.msra.mxu0 0
        %1604 = vmatprep.subr.bf16.mxu0 0
        %1605 = vmatpush1.bf16.msra.mxu0 0
        %1606 = vmatprep.subr.bf16.mxu0 0
        %1607 = vmatpush1.bf16.msra.mxu0 0
        %1608 = vmatprep.subr.bf16.mxu0 0
        %1609 = vmatpush1.bf16.msra.mxu0 0
        %1610 = vmatprep.subr.bf16.mxu0 0
        %1611 = vmatpush1.bf16.msra.mxu0 0
        %1612 = vmatprep.subr.bf16.mxu0 0
        %1613 = vmatpush1.bf16.msra.mxu0 0
        %1614 = vmatprep.subr.bf16.mxu0 0
        %1615 = vmatpush1.bf16.msra.mxu0 0
        %1616 = vmatprep.subr.bf16.mxu0 0
        %1617 = vmatpush1.bf16.msra.mxu0 0
        %1618 = vmatprep.subr.bf16.mxu0 0
        %1619 = vmatpush1.bf16.msra.mxu0 0
        %1620 = vmatprep.subr.bf16.mxu0 0
        %1621 = vmatpush1.bf16.msra.mxu0 0
        %1622 = vmatprep.subr.bf16.mxu0 0
        %1623 = vmatpush1.bf16.msra.mxu0 0
        %1624 = vmatprep.subr.bf16.mxu0 0
        %1625 = vmatpush1.bf16.msra.mxu0 0
        %1626 = vmatprep.subr.bf16.mxu0 0
        %1627 = vmatpush1.bf16.msra.mxu0 0
        %1628 = vmatprep.mubr.bf16.mxu0 0
        %1629 = vmatmul.mubr.bf16.gmra.mrb[0].mxu0 %v1582
        %v1630 = vpop.f32.mrb[0].mxu0
        %v1631 = vadd.f32 0.0, %v1630
        %v1632 = vpop.f32.mrb[0].mxu0
        %v1633 = vpop.f32.mrb[0].mxu0
        %v1634 = vadd.f32 0.0, %v1633
        %v1635 = vpop.f32.mrb[0].mxu0
        %1636 = vmatprep.mubr.bf16.mxu0 0
        %1637 = vmatmul.mubr.bf16.gmra.mrb[0].mxu0 %v1585
        %v1638 = vpop.f32.mrb[0].mxu0
        %v1639 = vadd.f32 0.0, %v1638
        %v1640 = vpop.f32.mrb[0].mxu0
        %v1641 = vpop.f32.mrb[0].mxu0
        %v1642 = vadd.f32 0.0, %v1641
        %v1643 = vpop.f32.mrb[0].mxu0
        %1644 = vmatprep.mubr.bf16.mxu0 0
        %1645 = vmatmul.mubr.bf16.gmra.mrb[0].mxu0 %v1588
        %v1646 = vpop.f32.mrb[0].mxu0
        %v1647 = vadd.f32 0.0, %v1646
        %v1648 = vpop.f32.mrb[0].mxu0
        %v1649 = vpop.f32.mrb[0].mxu0
        %v1650 = vadd.f32 0.0, %v1649
        %v1651 = vpop.f32.mrb[0].mxu0
        %1652 = vmatprep.mubr.bf16.mxu0 0
        %1653 = vmatmul.mubr.bf16.gmra.mrb[0].mxu0 %v1591
        %v1654 = vpop.f32.mrb[0].mxu0
        %v1655 = vadd.f32 0.0, %v1654
        %v1656 = vpop.f32.mrb[0].mxu0
        %v1657 = vpop.f32.mrb[0].mxu0
        %v1658 = vadd.f32 0.0, %v1657
        %v1659 = vpop.f32.mrb[0].mxu0
        %1660 = vdwg.mxu0
        %v1661 = vadd.f32 %v1451, %v1631
        %v1662 = vadd.f32 %v1452, %v1634
        %v1663 = vadd.f32 %v1453, %v1639
        %v1664 = vadd.f32 %v1454, %v1642
        %v1665 = vadd.f32 %v1455, %v1647
        %v1666 = vadd.f32 %v1456, %v1650
        %v1667 = vadd.f32 %v1457, %v1655
        %v1668 = vadd.f32 %v1458, %v1658
        %v1669 = vld [vmem:[%s1340] sm:$0xe]
        %v1670 = vld [vmem:[%s1340 + $0xc] sm:$0xe]
        %v1671 = vld [vmem:[%s1340 + $0x18] sm:$0xe]
        %v1672 = vld [vmem:[%s1340 + $0x24] sm:$0xe]
        %v1685 = vrot.slane %v1669, 5
        %v1686 = vrot.slane %v1685, 4
        %v1687 = vrot.slane %v1460, 5
        %v1688 = vsel %vm945, %v1686, %v1687
        %v1689 = vrot.slane %v1687, 4
        %v1690 = vrot.slane %v1461, 5
        %v1691 = vsel %vm945, %v1689, %v1690
        %v1692 = vrot.slane %v1670, 5
        %v1693 = vrot.slane %v1692, 4
        %v1694 = vrot.slane %v1463, 5
        %v1695 = vsel %vm945, %v1693, %v1694
        %v1696 = vrot.slane %v1694, 4
        %v1697 = vrot.slane %v1464, 5
        %v1698 = vsel %vm945, %v1696, %v1697
        %v1699 = vrot.slane %v1671, 5
        %v1700 = vrot.slane %v1699, 4
        %v1701 = vrot.slane %v1466, 5
        %v1702 = vsel %vm945, %v1700, %v1701
        %v1703 = vrot.slane %v1701, 4
        %v1704 = vrot.slane %v1467, 5
        %v1705 = vsel %vm945, %v1703, %v1704
        %v1706 = vrot.slane %v1672, 5
        %v1707 = vrot.slane %v1706, 4
        %v1708 = vrot.slane %v1469, 5
        %v1709 = vsel %vm945, %v1707, %v1708
        %v1710 = vrot.slane %v1708, 4
        %v1711 = vrot.slane %v1470, 5
        %v1712 = vsel %vm945, %v1710, %v1711
        %s1713 = scalar_lea.vmem %s2, 16
        %v1714 = vld [vmem:[%s1713] sm:$0x3]
        %v1715 = vunpack.c.l.b16 %v1688
        %v1716 = vunpack.c.l.b16 %v1691
        %v1717 = vunpack.c.l.b16 %v1695
        %v1718 = vunpack.c.l.b16 %v1698
        %v1719 = vunpack.c.l.b16 %v1702
        %v1720 = vunpack.c.l.b16 %v1705
        %v1721 = vunpack.c.l.b16 %v1709
        %v1722 = vunpack.c.l.b16 %v1712
        %v1723 = vpack.c.b16 %v1716, %v1715
        %v1724 = vpack.c.b16 %v1718, %v1717
        %v1725 = vpack.c.b16 %v1720, %v1719
        %v1726 = vpack.c.b16 %v1722, %v1721
        %v1728 = vsel %vm503, %v1723, 0
        %v1731 = vsel %vm503, %v1724, 0
        %v1734 = vsel %vm503, %v1725, 0
        %v1737 = vsel %vm503, %v1726, 0
        %v1740 = vsel %vm516, %v1714, 0
        %1742 = vmatprep.subr.bf16.mxu0 0
        %1743 = vmatpush1.bf16.msra.mxu0 %v1740
        %1744 = vmatprep.subr.bf16.mxu0 0
        %1745 = vmatpush1.bf16.msra.mxu0 0
        %1746 = vmatprep.subr.bf16.mxu0 0
        %1747 = vmatpush1.bf16.msra.mxu0 0
        %1748 = vmatprep.subr.bf16.mxu0 0
        %1749 = vmatpush1.bf16.msra.mxu0 0
        %1750 = vmatprep.subr.bf16.mxu0 0
        %1751 = vmatpush1.bf16.msra.mxu0 0
        %1752 = vmatprep.subr.bf16.mxu0 0
        %1753 = vmatpush1.bf16.msra.mxu0 0
        %1754 = vmatprep.subr.bf16.mxu0 0
        %1755 = vmatpush1.bf16.msra.mxu0 0
        %1756 = vmatprep.subr.bf16.mxu0 0
        %1757 = vmatpush1.bf16.msra.mxu0 0
        %1758 = vmatprep.subr.bf16.mxu0 0
        %1759 = vmatpush1.bf16.msra.mxu0 0
        %1760 = vmatprep.subr.bf16.mxu0 0
        %1761 = vmatpush1.bf16.msra.mxu0 0
        %1762 = vmatprep.subr.bf16.mxu0 0
        %1763 = vmatpush1.bf16.msra.mxu0 0
        %1764 = vmatprep.subr.bf16.mxu0 0
        %1765 = vmatpush1.bf16.msra.mxu0 0
        %1766 = vmatprep.subr.bf16.mxu0 0
        %1767 = vmatpush1.bf16.msra.mxu0 0
        %1768 = vmatprep.subr.bf16.mxu0 0
        %1769 = vmatpush1.bf16.msra.mxu0 0
        %1770 = vmatprep.subr.bf16.mxu0 0
        %1771 = vmatpush1.bf16.msra.mxu0 0
        %1772 = vmatprep.subr.bf16.mxu0 0
        %1773 = vmatpush1.bf16.msra.mxu0 0
        %1774 = vmatprep.mubr.bf16.mxu0 0
        %1775 = vmatmul.mubr.bf16.gmra.mrb[0].mxu0 %v1728
        %v1776 = vpop.f32.mrb[0].mxu0
        %v1777 = vadd.f32 0.0, %v1776
        %v1778 = vpop.f32.mrb[0].mxu0
        %v1779 = vpop.f32.mrb[0].mxu0
        %v1780 = vadd.f32 0.0, %v1779
        %v1781 = vpop.f32.mrb[0].mxu0
        %1782 = vmatprep.mubr.bf16.mxu0 0
        %1783 = vmatmul.mubr.bf16.gmra.mrb[0].mxu0 %v1731
        %v1784 = vpop.f32.mrb[0].mxu0
        %v1785 = vadd.f32 0.0, %v1784
        %v1786 = vpop.f32.mrb[0].mxu0
        %v1787 = vpop.f32.mrb[0].mxu0
        %v1788 = vadd.f32 0.0, %v1787
        %v1789 = vpop.f32.mrb[0].mxu0
        %1790 = vmatprep.mubr.bf16.mxu0 0
        %1791 = vmatmul.mubr.bf16.gmra.mrb[0].mxu0 %v1734
        %v1792 = vpop.f32.mrb[0].mxu0
        %v1793 = vadd.f32 0.0, %v1792
        %v1794 = vpop.f32.mrb[0].mxu0
        %v1795 = vpop.f32.mrb[0].mxu0
        %v1796 = vadd.f32 0.0, %v1795
        %v1797 = vpop.f32.mrb[0].mxu0
        %1798 = vmatprep.mubr.bf16.mxu0 0
        %1799 = vmatmul.mubr.bf16.gmra.mrb[0].mxu0 %v1737
        %v1800 = vpop.f32.mrb[0].mxu0
        %v1801 = vadd.f32 0.0, %v1800
        %v1802 = vpop.f32.mrb[0].mxu0
        %v1803 = vpop.f32.mrb[0].mxu0
        %v1804 = vadd.f32 0.0, %v1803
        %v1805 = vpop.f32.mrb[0].mxu0
        %1806 = vdwg.mxu0
        %v1807 = vadd.f32 %v1661, %v1777
        %v1808 = vadd.f32 %v1662, %v1780
        %v1809 = vadd.f32 %v1663, %v1785
        %v1810 = vadd.f32 %v1664, %v1788
        %v1811 = vadd.f32 %v1665, %v1793
        %v1812 = vadd.f32 %v1666, %v1796
        %v1813 = vadd.f32 %v1667, %v1801
        %v1814 = vadd.f32 %v1668, %v1804
        %v1815 = vld [vmem:[%s3 + $0x1] sm:$0x1]
        %v1816 = vlaneseq
        %v1817 = vshrl.u32 %v1816, 7
        %v1818 = vsub.s32 0, %v1817
        %v1819 = vrot.slane %v1815, %v1818
        %v1820 = vadd.f32 %v1807, %v1819
        %v1821 = vadd.f32 %v1808, %v1819
        %v1822 = vadd.f32 %v1809, %v1819
        %v1823 = vadd.f32 %v1810, %v1819
        %v1824 = vadd.f32 %v1811, %v1819
        %v1825 = vadd.f32 %v1812, %v1819
        %v1826 = vadd.f32 %v1813, %v1819
        %v1827 = vadd.f32 %v1814, %v1819
        %vm1828 = vcmp.gt.f32.partialorder %v1820, %v590
        %vm1829 = vcmp.gt.f32.partialorder %v1821, %v591
        %vm1830 = vcmp.gt.f32.partialorder %v1822, %v592
        %vm1831 = vcmp.gt.f32.partialorder %v1823, %v593
        %vm1832 = vcmp.gt.f32.partialorder %v1824, %v594
        %vm1833 = vcmp.gt.f32.partialorder %v1825, %v595
        %vm1834 = vcmp.gt.f32.partialorder %v1826, %v596
        %vm1835 = vcmp.gt.f32.partialorder %v1827, %v597
        %v1836 = vmax.f32 %v1820, %v590
        %v1837 = vmax.f32 %v1821, %v591
        %v1838 = vmax.f32 %v1822, %v592
        %v1839 = vmax.f32 %v1823, %v593
        %v1840 = vmax.f32 %v1824, %v594
        %v1841 = vmax.f32 %v1825, %v595
        %v1842 = vmax.f32 %v1826, %v596
        %v1843 = vmax.f32 %v1827, %v597
        %v1844 = vld [vmem:[%s4 + $0x1] sm:$0x1]
        %v1845 = vlaneseq
        %v1846 = vshrl.u32 %v1845, 7
        %v1847 = vsub.s32 0, %v1846
        %v1848 = vrot.slane %v1844, %v1847
        %v1849 = vlaneseq
        %v1850 = vshrl.u32 %v1849, 7
        %v1851 = vsub.s32 0, %v1850
        %v1852 = vrot.slane %v598, %v1851
        %v1853 = vsel %vm1828, %v1848, %v1852
        %v1854 = vsel %vm1829, %v1848, %v1852
        %v1855 = vsel %vm1830, %v1848, %v1852
        %v1856 = vsel %vm1831, %v1848, %v1852
        %v1857 = vsel %vm1832, %v1848, %v1852
        %v1858 = vsel %vm1833, %v1848, %v1852
        %v1859 = vsel %vm1834, %v1848, %v1852
        %v1860 = vsel %vm1835, %v1848, %v1852
        %v1861 = vld [vmem:[%s5 + $0x1] sm:$0x1]
        %v1862 = vlaneseq
        %v1863 = vshrl.u32 %v1862, 7
        %v1864 = vsub.s32 0, %v1863
        %v1865 = vrot.slane %v1861, %v1864
        %v1866 = vlaneseq
        %v1867 = vshrl.u32 %v1866, 7
        %v1868 = vsub.s32 0, %v1867
        %v1869 = vrot.slane %v599, %v1868
        %v1870 = vsel %vm1828, %v1865, %v1869
        %v1871 = vsel %vm1829, %v1865, %v1869
        %v1872 = vsel %vm1830, %v1865, %v1869
        %v1873 = vsel %vm1831, %v1865, %v1869
        %v1874 = vsel %vm1832, %v1865, %v1869
        %v1875 = vsel %vm1833, %v1865, %v1869
        %v1876 = vsel %vm1834, %v1865, %v1869
        %v1877 = vsel %vm1835, %v1865, %v1869
        %v1878 = vmul.f32 %v1836, %v1853
        %v1879 = vmul.f32 %v1837, %v1854
        %v1880 = vmul.f32 %v1838, %v1855
        %v1881 = vmul.f32 %v1839, %v1856
        %v1882 = vmul.f32 %v1840, %v1857
        %v1883 = vmul.f32 %v1841, %v1858
        %v1884 = vmul.f32 %v1842, %v1859
        %v1885 = vmul.f32 %v1843, %v1860
        %v1886 = vadd.f32 %v1878, %v1870
        %v1887 = vadd.f32 %v1879, %v1871
        %v1888 = vadd.f32 %v1880, %v1872
        %v1889 = vadd.f32 %v1881, %v1873
        %v1890 = vadd.f32 %v1882, %v1874
        %v1891 = vadd.f32 %v1883, %v1875
        %v1892 = vadd.f32 %v1884, %v1876
        %v1893 = vadd.f32 %v1885, %v1877
        %v1894 = vpack.c.bf16 %v1887, %v1886
        %v1895 = vpack.c.bf16 %v1889, %v1888
        %v1896 = vpack.c.bf16 %v1891, %v1890
        %v1897 = vpack.c.bf16 %v1893, %v1892
        %v1902 = vunpack.c.l.b16 %v1894
        %v1903 = vunpack.c.h.b16 %v1894
        %v1904 = vunpack.c.l.b16 %v1895
        %v1905 = vunpack.c.h.b16 %v1895
        %v1906 = vunpack.c.l.b16 %v1896
        %v1907 = vunpack.c.h.b16 %v1896
        %v1908 = vunpack.c.l.b16 %v1897
        %v1909 = vunpack.c.h.b16 %v1897
        %v1910 = vpack.c.b16 %v1902, %v1902
        %v1911 = vpack.c.b16 %v1903, %v1903
        %v1912 = vpack.c.b16 %v1904, %v1904
        %v1913 = vpack.c.b16 %v1905, %v1905
        %v1914 = vpack.c.b16 %v1906, %v1906
        %v1915 = vpack.c.b16 %v1907, %v1907
        %v1916 = vpack.c.b16 %v1908, %v1908
        %v1917 = vpack.c.b16 %v1909, %v1909
        %1926 = vst [vmem:[%s309] sm:$0xf] %v1910
        %1927 = vst [vmem:[%s309 + $0x4] sm:$0xf] %v1911
        %1928 = vst [vmem:[%s309 + $0x8] sm:$0xf] %v1912
        %1929 = vst [vmem:[%s309 + $0xc] sm:$0xf] %v1913
        %1930 = vst [vmem:[%s309 + $0x10] sm:$0xf] %v1914
        %1931 = vst [vmem:[%s309 + $0x14] sm:$0xf] %v1915
        %1932 = vst [vmem:[%s309 + $0x18] sm:$0xf] %v1916
        %1933 = vst [vmem:[%s309 + $0x1c] sm:$0xf] %v1917
        %s1934 = sand.u32 %s186, 1
        %s1935 = scalar_lea.sflag [#allocation4], %s1934
        %s1936 = sand.u32 %s186, 1
        %s1937 = smul.addr %s1936, 32
        %s1938 = scalar_lea.vmem [#allocation3], %s1937
        // Predicated region
        $region45: #{tpu_custom_call.1} parent=43 // pred_check
          %p1939 = pneg %p196
        $region46: #{tpu_custom_call.1} parent=43 // pred_check_branch
          %1941 = sbr.rel (%p1939) target = $region48
        $region47: #{tpu_custom_call.1} parent=43 // pred_region
          %s1942 = smul.u32 4, %s25
          %s1944 = ssub.s32 512, 512
          %1945 = vsyncadd %s1935, %s1944
          %s1946 = smul.addr %s1942, 2
          %s1947 = smul.addr %s24, 32
          %s1948 = sadd.s32 %s1946, %s1947
          %s1949 = smul.addr %s1948, 64
          %s1950 = scalar_lea.hbm %s6, %s1949
          %s1951 = sshll.u32 %s1938, 4
          %s1952 = int_to_ptr.vmem [resolvable:$true] %s1951
          %1957 = dma.vmem_to_hbm [thread:$0]  %s1952, 512, %s1950, %s1935, 64, 64, 4
        $region48: #{tpu_custom_call.1} parent=43 // pred_fallthru
          _
      $region44: #{tpu_custom_call.1} parent=5 // pred_fallthru
        _
      %p1958 = scmp.le.s32.totalorder 2, %s15
      // Predicated region
      $region49: #{tpu_custom_call.1} parent=5 // pred_check
        %p1959 = pneg %p1958
      $region50: #{tpu_custom_call.1} parent=5 // pred_check_branch
        %1961 = sbr.rel (%p1959) target = $region52
      $region51: #{tpu_custom_call.1} parent=5 // pred_region
        %s1962 = ssub.s32 %s15, 2
        // Predicated region
        $region53: #{tpu_custom_call.1} parent=51 // pred_check
          %p1963 = pneg %p202
        $region54: #{tpu_custom_call.1} parent=51 // pred_check_branch
          %1965 = sbr.rel (%p1963) target = $region56
        $region55: #{tpu_custom_call.1} parent=51 // pred_region
          %s1966 = sand.u32 %s187, 1
          %s1967 = scalar_lea.sflag [#allocation4], %s1966
          %s1968 = sand.u32 %s187, 1
          %s1969 = smul.addr %s1968, 32
          %s1970 = scalar_lea.vmem [#allocation3], %s1969
          %1971 = dma.done %s1967, 512
        $region56: #{tpu_custom_call.1} parent=51 // pred_fallthru
          _
      $region52: #{tpu_custom_call.1} parent=5 // pred_fallthru
        _
    $region6: #{tpu_custom_call.1} parent=1 // loop_footer
      %s19 = sadd.s32 1, %s15
    $region7: #{tpu_custom_call.1} parent=1 // loop_footer_branch
      %14 = sbr.rel target = $region3
    $region8: #{tpu_custom_call.1} parent=1 // loop_exit
      _
    %1972 = vsyncpa [#allocation4], 1
    %s1973 = scalar_lea.sflag [#allocation4], 1
    %1974 = vsyncpa %s1973, 1

</llo_original>
